<compile_context>
chip_gen: v5e
topology: v5e:2x2
jax: 0.10.0
libtpu: 0.0.40
codegen_flags: <defaults>
</compile_context>

<pallas_src>
import functools
import math

import jax
import jax.numpy as jnp
from jax import lax
from jax.experimental import pallas as pl
from jax.experimental.pallas import tpu as pltpu


def _residual_lstm_kernel(T, Bp, H,
                          x_ref, xaug_ref, wih_ref, bg_ref, wbig_ref,
                          b1_ref, w2_ref, b2_ref, out_ref):
    GH = 8 * H           # combined gate width (both directions, gate-major layout)
    ZH = 4 * H           # MLP layer-1 width per direction (= 4 * d_model)

    # Input-gate matmul: all timesteps, BOTH directions, one MXU pass.
    # gx row block s = [i_f|i_b|f_f|f_b|g_f|g_b|o_f|o_b] with fwd gates of x[s] and
    # bwd gates of x[T-1-s]; bih+bhh of both directions pre-fused in bg.
    gx = jnp.dot(xaug_ref[...], wih_ref[...],
                 preferred_element_type=jnp.float32) + bg_ref[...]

    # (2H, 8H + 8D) bf16: [ blockdiag(Whh_f, Whh_b) | blockdiag(W1_f, W1_b) ].
    w_big = wbig_ref[...]

    h_bf = jnp.zeros((Bp, 2 * H), jnp.bfloat16)   # [h_fwd | h_bwd], bf16 MXU operand
    c = jnp.zeros((Bp, 2 * H), jnp.float32)       # [c_fwd | c_bwd], kept in f32

    zf = []   # zf[t]: (Bp, 4D) layer-1 partial from h_fwd at output time t
    zb = []   # zb[k]: layer-1 partial from h_bwd, destined for output time T-1-k

    # Statically unrolled joint fwd/bwd recurrence (T is small and static).
    for s in range(T):
        g = gx[s * Bp:(s + 1) * Bp, :]            # sublane-aligned row block
        if s > 0:
            # ONE bf16 MXU issue: recurrent gates for this step AND the MLP layer-1
            # partial of the previous step's hidden state (rides in the MXU shadow).
            mm = jnp.dot(h_bf, w_big, preferred_element_type=jnp.float32)
            g = g + mm[:, :GH]
            zf.append(mm[:, GH:GH + ZH])
            zb.append(mm[:, GH + ZH:])
        # Joint cell, PyTorch gate order (i, f, g, o), gate-major lanes [fwd|bwd].
        sig_if = jax.nn.sigmoid(g[:, :4 * H])     # i and f lanes only
        i_g = sig_if[:, :2 * H]
        f_g = sig_if[:, 2 * H:]
        g_g = jnp.tanh(g[:, 4 * H:6 * H])
        o_g = jax.nn.sigmoid(g[:, 6 * H:])
        c = f_g * c + i_g * g_g
        h = o_g * jnp.tanh(c)                     # lanes [0,H)=fwd, [H,2H)=bwd
        h_bf = h.astype(jnp.bfloat16)

    # Layer-1 partial of the final step's hidden state (W1 half of w_big only).
    mm = jnp.dot(h_bf, w_big[:, GH:], preferred_element_type=jnp.float32)
    zf.append(mm[:, :ZH])
    zb.append(mm[:, ZH:])

    # z[t] = h_fwd[t] @ W1_f + h_bwd[t] @ W1_b + b1 ; zb was produced in reverse time.
    z = jnp.concatenate(zf, axis=0) + jnp.concatenate(zb[::-1], axis=0) + b1_ref[...]
    z = jnp.maximum(z, 0.0)                       # ReLU
    y = jnp.dot(z, w2_ref[...], preferred_element_type=jnp.float32) + b2_ref[...]
    out_ref[...] = x_ref[...] + y                 # x re-read here, not live over loop


def _fuse_dirs_gate_major(a_f, a_b, H):
    """a_f:(Kf,4H), a_b:(Kb,4H) per-direction weights (gate order i,f,g,o) ->
    (Kf+Kb, 8H) block-diagonal with gate-major columns [g_f | g_b] per gate."""
    kf, kb = a_f.shape[0], a_b.shape[0]
    cols = []
    for k in range(4):
        blk = jnp.zeros((kf + kb, 2 * H), jnp.float32)
        blk = blk.at[:kf, :H].set(a_f[:, k * H:(k + 1) * H])
        blk = blk.at[kf:, H:].set(a_b[:, k * H:(k + 1) * H])
        cols.append(blk)
    return jnp.concatenate(cols, axis=1)


def _bias_gate_major(b_f, b_b, H):
    parts = []
    for k in range(4):
        parts.append(b_f[k * H:(k + 1) * H])
        parts.append(b_b[k * H:(k + 1) * H])
    return jnp.concatenate(parts)[None, :]        # (1, 8H)


def pack_params(p, d_model):
    """PyTorch-shaped params -> fused kernel layout."""
    H = d_model
    ZD = 4 * d_model
    wih_aug = _fuse_dirs_gate_major(p["wih_f"].T, p["wih_b"].T, H)      # (2D, 8H)
    w_rec = _fuse_dirs_gate_major(p["whh_f"].T, p["whh_b"].T, H)        # (2H, 8H)
    b_gates = _bias_gate_major(p["bih_f"] + p["bhh_f"],
                               p["bih_b"] + p["bhh_b"], H)              # (1, 8H)
    w1_T = p["w1"].T                                                    # (2D, 4D)
    w1_cat = jnp.zeros((2 * H, 2 * ZD), jnp.float32)
    w1_cat = w1_cat.at[:H, :ZD].set(w1_T[:H])
    w1_cat = w1_cat.at[H:, ZD:].set(w1_T[H:])
    w_big = jnp.concatenate([w_rec, w1_cat], axis=1).astype(jnp.bfloat16)
    return {
        "wih_aug": wih_aug,
        "b_gates": b_gates,
        "w_big": w_big,                                                 # bf16
        "b1": p["b1"][None, :],
        "w2_T": p["w2"].T,
        "b2": p["b2"][None, :],
    }


def residual_lstm(x, kp):
    T, B, D = x.shape
    H = D
    Bp = ((B + 7) // 8) * 8                       # pad batch to the sublane tile
    if Bp != B:
        x_pad = jnp.concatenate([x, jnp.zeros((T, Bp - B, D), x.dtype)], axis=1)
    else:
        x_pad = x
    x2d = x_pad.reshape(T * Bp, D)
    # [x | time-reversed x]: lets a single matmul produce fwd(t=s) and bwd(t=T-1-s)
    # input gates in the same row block.
    x_aug = jnp.concatenate([x2d, x_pad[::-1].reshape(T * Bp, D)], axis=1)

    kernel = functools.partial(_residual_lstm_kernel, T, Bp, H)
    out2d = pl.pallas_call(
        kernel,
        out_shape=jax.ShapeDtypeStruct((T * Bp, D), jnp.float32),
        in_specs=[pl.BlockSpec(memory_space=pltpu.MemorySpace.VMEM)] * 8,
        out_specs=pl.BlockSpec(memory_space=pltpu.MemorySpace.VMEM),
    )(x2d, x_aug, kp["wih_aug"], kp["b_gates"], kp["w_big"],
      kp["b1"], kp["w2_T"], kp["b2"])
    return out2d.reshape(T, Bp, D)[:, :B, :]


def init_params(key, d_model):
    """Deterministic synthetic parameters with PyTorch shapes/init conventions."""
    H = d_model
    ks = jax.random.split(key, 12)
    klstm = 1.0 / math.sqrt(H)
    k1 = 1.0 / math.sqrt(2 * d_model)
    k2 = 1.0 / math.sqrt(4 * d_model)

    def u(k, shape, bound):
        return jax.random.uniform(k, shape, jnp.float32, -bound, bound)

    return {
        "wih_f": u(ks[0], (4 * H, d_model), klstm),
        "whh_f": u(ks[1], (4 * H, H), klstm),
        "bih_f": u(ks[2], (4 * H,), klstm),
        "bhh_f": u(ks[3], (4 * H,), klstm),
        "wih_b": u(ks[4], (4 * H, d_model), klstm),
        "whh_b": u(ks[5], (4 * H, H), klstm),
        "bih_b": u(ks[6], (4 * H,), klstm),
        "bhh_b": u(ks[7], (4 * H,), klstm),
        "w1": u(ks[8], (4 * d_model, 2 * d_model), k1),
        "b1": u(ks[9], (4 * d_model,), k1),
        "w2": u(ks[10], (d_model, 4 * d_model), k2),
        "b2": u(ks[11], (d_model,), k2),
    }


def reference_forward(x, p):
    """Plain-JAX f32 reference mirroring PyTorch ResidualLSTM.forward."""
    T, B, D = x.shape
    H = D

    def direction(wih, whh, bih, bhh, xs):
        def cell(carry, xt):
            h, c = carry
            g = xt @ wih.T + bih + h @ whh.T + bhh
            i = jax.nn.sigmoid(g[:, :H])
            f = jax.nn.sigmoid(g[:, H:2 * H])
            gg = jnp.tanh(g[:, 2 * H:3 * H])
            o = jax.nn.sigmoid(g[:, 3 * H:])
            c = f * c + i * gg
            h = o * jnp.tanh(c)
            return (h, c), h
        init = (jnp.zeros((B, H), jnp.float32), jnp.zeros((B, H), jnp.float32))
        _, hs = lax.scan(cell, init, xs)
        return hs

    hf = direction(p["wih_f"], p["whh_f"], p["bih_f"], p["bhh_f"], x)
    hb = direction(p["wih_b"], p["whh_b"], p["bih_b"], p["bhh_b"], x[::-1])[::-1]
    h = jnp.concatenate([hf, hb], axis=-1)
    z = jnp.maximum(h @ p["w1"].T + p["b1"], 0.0)
    y = z @ p["w2"].T + p["b2"]
    return x + y


if __name__ == "__main__":
    T, B, D = 8, 2, 32          # seq=8, batch=2, d_model=32
    key = jax.random.PRNGKey(0)
    kx, kp = jax.random.split(key)
    x = jax.random.normal(kx, (T, B, D), jnp.float32)
    params = init_params(kp, D)
    kparams = pack_params(params, D)

    out = jax.block_until_ready(residual_lstm(x, kparams))
    ref = jax.block_until_ready(reference_forward(x, params))

    assert out.shape == (T, B, D)
    # Tolerance 1e-2: the in-loop matmuls use bf16 operands (f32 accumulation);
    # cell state and pointwise math remain f32.  Observed error is a few 1e-3.
    err = float(jnp.max(jnp.abs(out - ref)))
    assert err < 1e-2, err

    print("KERNEL_OK")
</pallas_src>

<mosaic_0001>
module attributes {stable_mosaic.version = 11 : i64} {
  func.func @_residual_lstm_kernel(%arg0: memref<64x32xf32, #tpu.memory_space<vmem>>, %arg1: memref<64x64xf32, #tpu.memory_space<vmem>>, %arg2: memref<64x256xf32, #tpu.memory_space<vmem>>, %arg3: memref<1x256xf32, #tpu.memory_space<vmem>>, %arg4: memref<64x512xbf16, #tpu.memory_space<vmem>>, %arg5: memref<1x128xf32, #tpu.memory_space<vmem>>, %arg6: memref<128x32xf32, #tpu.memory_space<vmem>>, %arg7: memref<1x32xf32, #tpu.memory_space<vmem>>, %arg8: memref<64x32xf32, #tpu.memory_space<vmem>>) attributes {dimension_semantics = [], scalar_prefetch = 0 : i64, scratch_operands = 0 : i64, tpu.core_type = #tpu.core_type<tc>} {
    %c0 = arith.constant 0 : index
    %c0_0 = arith.constant 0 : index
    %0 = vector.load %arg1[%c0, %c0_0] : memref<64x64xf32, #tpu.memory_space<vmem>>, vector<64x64xf32>
    %c0_1 = arith.constant 0 : index
    %c0_2 = arith.constant 0 : index
    %1 = vector.load %arg2[%c0_1, %c0_2] : memref<64x256xf32, #tpu.memory_space<vmem>>, vector<64x256xf32>
    %cst = arith.constant dense<0.000000e+00> : vector<64x256xf32>
    %2 = tpu.matmul %0, %1, %cst {dimension_numbers = #tpu.dot_dimension_numbers<[1], [0], [0], [1], [0, 0, 1, 1], [], []>} : vector<64x64xf32>, vector<64x256xf32>, vector<64x256xf32> -> vector<64x256xf32>
    %c0_3 = arith.constant 0 : index
    %c0_4 = arith.constant 0 : index
    %3 = vector.load %arg3[%c0_3, %c0_4] : memref<1x256xf32, #tpu.memory_space<vmem>>, vector<1x256xf32>
    %4 = vector.broadcast %3 : vector<1x256xf32> to vector<64x256xf32>
    %5 = arith.addf %2, %4 : vector<64x256xf32>
    %c0_5 = arith.constant 0 : index
    %c0_6 = arith.constant 0 : index
    %6 = vector.load %arg4[%c0_5, %c0_6] : memref<64x512xbf16, #tpu.memory_space<vmem>>, vector<64x512xbf16>
    %cst_7 = arith.constant 0.000000e+00 : f32
    %7 = vector.broadcast %cst_7 : f32 to vector<8x64xf32>
    %8 = vector.extract_strided_slice %5 {offsets = [0, 0], sizes = [8, 256], strides = [1, 1]} : vector<64x256xf32> to vector<8x256xf32>
    %9 = vector.extract_strided_slice %8 {offsets = [0, 0], sizes = [8, 128], strides = [1, 1]} : vector<8x256xf32> to vector<8x128xf32>
    %10 = arith.negf %9 : vector<8x128xf32>
    %11 = math.exp %10 : vector<8x128xf32>
    %cst_8 = arith.constant 1.000000e+00 : f32
    %12 = vector.broadcast %cst_8 : f32 to vector<8x128xf32>
    %13 = arith.addf %12, %11 : vector<8x128xf32>
    %14 = arith.divf %12, %13 : vector<8x128xf32>
    %15 = vector.extract_strided_slice %14 {offsets = [0, 0], sizes = [8, 64], strides = [1, 1]} : vector<8x128xf32> to vector<8x64xf32>
    %16 = vector.extract_strided_slice %14 {offsets = [0, 64], sizes = [8, 64], strides = [1, 1]} : vector<8x128xf32> to vector<8x64xf32>
    %17 = vector.extract_strided_slice %8 {offsets = [0, 128], sizes = [8, 64], strides = [1, 1]} : vector<8x256xf32> to vector<8x64xf32>
    %18 = math.tanh %17 : vector<8x64xf32>
    %19 = vector.extract_strided_slice %8 {offsets = [0, 192], sizes = [8, 64], strides = [1, 1]} : vector<8x256xf32> to vector<8x64xf32>
    %20 = arith.negf %19 : vector<8x64xf32>
    %21 = math.exp %20 : vector<8x64xf32>
    %cst_9 = arith.constant 1.000000e+00 : f32
    %22 = vector.broadcast %cst_9 : f32 to vector<8x64xf32>
    %23 = arith.addf %22, %21 : vector<8x64xf32>
    %24 = arith.divf %22, %23 : vector<8x64xf32>
    %25 = arith.mulf %16, %7 : vector<8x64xf32>
    %26 = arith.mulf %15, %18 : vector<8x64xf32>
    %27 = arith.addf %25, %26 : vector<8x64xf32>
    %28 = math.tanh %27 : vector<8x64xf32>
    %29 = arith.mulf %24, %28 : vector<8x64xf32>
    %30 = arith.truncf %29 : vector<8x64xf32> to vector<8x64xbf16>
    %31 = vector.extract_strided_slice %5 {offsets = [8, 0], sizes = [8, 256], strides = [1, 1]} : vector<64x256xf32> to vector<8x256xf32>
    %cst_10 = arith.constant dense<0.000000e+00> : vector<8x512xf32>
    %32 = tpu.matmul %30, %6, %cst_10 {dimension_numbers = #tpu.dot_dimension_numbers<[1], [0], [0], [1], [0, 0, 1, 1], [], []>} : vector<8x64xbf16>, vector<64x512xbf16>, vector<8x512xf32> -> vector<8x512xf32>
    %33 = vector.extract_strided_slice %32 {offsets = [0, 0], sizes = [8, 256], strides = [1, 1]} : vector<8x512xf32> to vector<8x256xf32>
    %34 = arith.addf %31, %33 : vector<8x256xf32>
    %35 = vector.extract_strided_slice %32 {offsets = [0, 256], sizes = [8, 128], strides = [1, 1]} : vector<8x512xf32> to vector<8x128xf32>
    %36 = vector.extract_strided_slice %32 {offsets = [0, 384], sizes = [8, 128], strides = [1, 1]} : vector<8x512xf32> to vector<8x128xf32>
    %37 = vector.extract_strided_slice %34 {offsets = [0, 0], sizes = [8, 128], strides = [1, 1]} : vector<8x256xf32> to vector<8x128xf32>
    %38 = arith.negf %37 : vector<8x128xf32>
    %39 = math.exp %38 : vector<8x128xf32>
    %cst_11 = arith.constant 1.000000e+00 : f32
    %40 = vector.broadcast %cst_11 : f32 to vector<8x128xf32>
    %41 = arith.addf %40, %39 : vector<8x128xf32>
    %42 = arith.divf %40, %41 : vector<8x128xf32>
    %43 = vector.extract_strided_slice %42 {offsets = [0, 0], sizes = [8, 64], strides = [1, 1]} : vector<8x128xf32> to vector<8x64xf32>
    %44 = vector.extract_strided_slice %42 {offsets = [0, 64], sizes = [8, 64], strides = [1, 1]} : vector<8x128xf32> to vector<8x64xf32>
    %45 = vector.extract_strided_slice %34 {offsets = [0, 128], sizes = [8, 64], strides = [1, 1]} : vector<8x256xf32> to vector<8x64xf32>
    %46 = math.tanh %45 : vector<8x64xf32>
    %47 = vector.extract_strided_slice %34 {offsets = [0, 192], sizes = [8, 64], strides = [1, 1]} : vector<8x256xf32> to vector<8x64xf32>
    %48 = arith.negf %47 : vector<8x64xf32>
    %49 = math.exp %48 : vector<8x64xf32>
    %cst_12 = arith.constant 1.000000e+00 : f32
    %50 = vector.broadcast %cst_12 : f32 to vector<8x64xf32>
    %51 = arith.addf %50, %49 : vector<8x64xf32>
    %52 = arith.divf %50, %51 : vector<8x64xf32>
    %53 = arith.mulf %44, %27 : vector<8x64xf32>
    %54 = arith.mulf %43, %46 : vector<8x64xf32>
    %55 = arith.addf %53, %54 : vector<8x64xf32>
    %56 = math.tanh %55 : vector<8x64xf32>
    %57 = arith.mulf %52, %56 : vector<8x64xf32>
    %58 = arith.truncf %57 : vector<8x64xf32> to vector<8x64xbf16>
    %59 = vector.extract_strided_slice %5 {offsets = [16, 0], sizes = [8, 256], strides = [1, 1]} : vector<64x256xf32> to vector<8x256xf32>
    %cst_13 = arith.constant dense<0.000000e+00> : vector<8x512xf32>
    %60 = tpu.matmul %58, %6, %cst_13 {dimension_numbers = #tpu.dot_dimension_numbers<[1], [0], [0], [1], [0, 0, 1, 1], [], []>} : vector<8x64xbf16>, vector<64x512xbf16>, vector<8x512xf32> -> vector<8x512xf32>
    %61 = vector.extract_strided_slice %60 {offsets = [0, 0], sizes = [8, 256], strides = [1, 1]} : vector<8x512xf32> to vector<8x256xf32>
    %62 = arith.addf %59, %61 : vector<8x256xf32>
    %63 = vector.extract_strided_slice %60 {offsets = [0, 256], sizes = [8, 128], strides = [1, 1]} : vector<8x512xf32> to vector<8x128xf32>
    %64 = vector.extract_strided_slice %60 {offsets = [0, 384], sizes = [8, 128], strides = [1, 1]} : vector<8x512xf32> to vector<8x128xf32>
    %65 = vector.extract_strided_slice %62 {offsets = [0, 0], sizes = [8, 128], strides = [1, 1]} : vector<8x256xf32> to vector<8x128xf32>
    %66 = arith.negf %65 : vector<8x128xf32>
    %67 = math.exp %66 : vector<8x128xf32>
    %cst_14 = arith.constant 1.000000e+00 : f32
    %68 = vector.broadcast %cst_14 : f32 to vector<8x128xf32>
    %69 = arith.addf %68, %67 : vector<8x128xf32>
    %70 = arith.divf %68, %69 : vector<8x128xf32>
    %71 = vector.extract_strided_slice %70 {offsets = [0, 0], sizes = [8, 64], strides = [1, 1]} : vector<8x128xf32> to vector<8x64xf32>
    %72 = vector.extract_strided_slice %70 {offsets = [0, 64], sizes = [8, 64], strides = [1, 1]} : vector<8x128xf32> to vector<8x64xf32>
    %73 = vector.extract_strided_slice %62 {offsets = [0, 128], sizes = [8, 64], strides = [1, 1]} : vector<8x256xf32> to vector<8x64xf32>
    %74 = math.tanh %73 : vector<8x64xf32>
    %75 = vector.extract_strided_slice %62 {offsets = [0, 192], sizes = [8, 64], strides = [1, 1]} : vector<8x256xf32> to vector<8x64xf32>
    %76 = arith.negf %75 : vector<8x64xf32>
    %77 = math.exp %76 : vector<8x64xf32>
    %cst_15 = arith.constant 1.000000e+00 : f32
    %78 = vector.broadcast %cst_15 : f32 to vector<8x64xf32>
    %79 = arith.addf %78, %77 : vector<8x64xf32>
    %80 = arith.divf %78, %79 : vector<8x64xf32>
    %81 = arith.mulf %72, %55 : vector<8x64xf32>
    %82 = arith.mulf %71, %74 : vector<8x64xf32>
    %83 = arith.addf %81, %82 : vector<8x64xf32>
    %84 = math.tanh %83 : vector<8x64xf32>
    %85 = arith.mulf %80, %84 : vector<8x64xf32>
    %86 = arith.truncf %85 : vector<8x64xf32> to vector<8x64xbf16>
    %87 = vector.extract_strided_slice %5 {offsets = [24, 0], sizes = [8, 256], strides = [1, 1]} : vector<64x256xf32> to vector<8x256xf32>
    %cst_16 = arith.constant dense<0.000000e+00> : vector<8x512xf32>
    %88 = tpu.matmul %86, %6, %cst_16 {dimension_numbers = #tpu.dot_dimension_numbers<[1], [0], [0], [1], [0, 0, 1, 1], [], []>} : vector<8x64xbf16>, vector<64x512xbf16>, vector<8x512xf32> -> vector<8x512xf32>
    %89 = vector.extract_strided_slice %88 {offsets = [0, 0], sizes = [8, 256], strides = [1, 1]} : vector<8x512xf32> to vector<8x256xf32>
    %90 = arith.addf %87, %89 : vector<8x256xf32>
    %91 = vector.extract_strided_slice %88 {offsets = [0, 256], sizes = [8, 128], strides = [1, 1]} : vector<8x512xf32> to vector<8x128xf32>
    %92 = vector.extract_strided_slice %88 {offsets = [0, 384], sizes = [8, 128], strides = [1, 1]} : vector<8x512xf32> to vector<8x128xf32>
    %93 = vector.extract_strided_slice %90 {offsets = [0, 0], sizes = [8, 128], strides = [1, 1]} : vector<8x256xf32> to vector<8x128xf32>
    %94 = arith.negf %93 : vector<8x128xf32>
    %95 = math.exp %94 : vector<8x128xf32>
    %cst_17 = arith.constant 1.000000e+00 : f32
    %96 = vector.broadcast %cst_17 : f32 to vector<8x128xf32>
    %97 = arith.addf %96, %95 : vector<8x128xf32>
    %98 = arith.divf %96, %97 : vector<8x128xf32>
    %99 = vector.extract_strided_slice %98 {offsets = [0, 0], sizes = [8, 64], strides = [1, 1]} : vector<8x128xf32> to vector<8x64xf32>
    %100 = vector.extract_strided_slice %98 {offsets = [0, 64], sizes = [8, 64], strides = [1, 1]} : vector<8x128xf32> to vector<8x64xf32>
    %101 = vector.extract_strided_slice %90 {offsets = [0, 128], sizes = [8, 64], strides = [1, 1]} : vector<8x256xf32> to vector<8x64xf32>
    %102 = math.tanh %101 : vector<8x64xf32>
    %103 = vector.extract_strided_slice %90 {offsets = [0, 192], sizes = [8, 64], strides = [1, 1]} : vector<8x256xf32> to vector<8x64xf32>
    %104 = arith.negf %103 : vector<8x64xf32>
    %105 = math.exp %104 : vector<8x64xf32>
    %cst_18 = arith.constant 1.000000e+00 : f32
    %106 = vector.broadcast %cst_18 : f32 to vector<8x64xf32>
    %107 = arith.addf %106, %105 : vector<8x64xf32>
    %108 = arith.divf %106, %107 : vector<8x64xf32>
    %109 = arith.mulf %100, %83 : vector<8x64xf32>
    %110 = arith.mulf %99, %102 : vector<8x64xf32>
    %111 = arith.addf %109, %110 : vector<8x64xf32>
    %112 = math.tanh %111 : vector<8x64xf32>
    %113 = arith.mulf %108, %112 : vector<8x64xf32>
    %114 = arith.truncf %113 : vector<8x64xf32> to vector<8x64xbf16>
    %115 = vector.extract_strided_slice %5 {offsets = [32, 0], sizes = [8, 256], strides = [1, 1]} : vector<64x256xf32> to vector<8x256xf32>
    %cst_19 = arith.constant dense<0.000000e+00> : vector<8x512xf32>
    %116 = tpu.matmul %114, %6, %cst_19 {dimension_numbers = #tpu.dot_dimension_numbers<[1], [0], [0], [1], [0, 0, 1, 1], [], []>} : vector<8x64xbf16>, vector<64x512xbf16>, vector<8x512xf32> -> vector<8x512xf32>
    %117 = vector.extract_strided_slice %116 {offsets = [0, 0], sizes = [8, 256], strides = [1, 1]} : vector<8x512xf32> to vector<8x256xf32>
    %118 = arith.addf %115, %117 : vector<8x256xf32>
    %119 = vector.extract_strided_slice %116 {offsets = [0, 256], sizes = [8, 128], strides = [1, 1]} : vector<8x512xf32> to vector<8x128xf32>
    %120 = vector.extract_strided_slice %116 {offsets = [0, 384], sizes = [8, 128], strides = [1, 1]} : vector<8x512xf32> to vector<8x128xf32>
    %121 = vector.extract_strided_slice %118 {offsets = [0, 0], sizes = [8, 128], strides = [1, 1]} : vector<8x256xf32> to vector<8x128xf32>
    %122 = arith.negf %121 : vector<8x128xf32>
    %123 = math.exp %122 : vector<8x128xf32>
    %cst_20 = arith.constant 1.000000e+00 : f32
    %124 = vector.broadcast %cst_20 : f32 to vector<8x128xf32>
    %125 = arith.addf %124, %123 : vector<8x128xf32>
    %126 = arith.divf %124, %125 : vector<8x128xf32>
    %127 = vector.extract_strided_slice %126 {offsets = [0, 0], sizes = [8, 64], strides = [1, 1]} : vector<8x128xf32> to vector<8x64xf32>
    %128 = vector.extract_strided_slice %126 {offsets = [0, 64], sizes = [8, 64], strides = [1, 1]} : vector<8x128xf32> to vector<8x64xf32>
    %129 = vector.extract_strided_slice %118 {offsets = [0, 128], sizes = [8, 64], strides = [1, 1]} : vector<8x256xf32> to vector<8x64xf32>
    %130 = math.tanh %129 : vector<8x64xf32>
    %131 = vector.extract_strided_slice %118 {offsets = [0, 192], sizes = [8, 64], strides = [1, 1]} : vector<8x256xf32> to vector<8x64xf32>
    %132 = arith.negf %131 : vector<8x64xf32>
    %133 = math.exp %132 : vector<8x64xf32>
    %cst_21 = arith.constant 1.000000e+00 : f32
    %134 = vector.broadcast %cst_21 : f32 to vector<8x64xf32>
    %135 = arith.addf %134, %133 : vector<8x64xf32>
    %136 = arith.divf %134, %135 : vector<8x64xf32>
    %137 = arith.mulf %128, %111 : vector<8x64xf32>
    %138 = arith.mulf %127, %130 : vector<8x64xf32>
    %139 = arith.addf %137, %138 : vector<8x64xf32>
    %140 = math.tanh %139 : vector<8x64xf32>
    %141 = arith.mulf %136, %140 : vector<8x64xf32>
    %142 = arith.truncf %141 : vector<8x64xf32> to vector<8x64xbf16>
    %143 = vector.extract_strided_slice %5 {offsets = [40, 0], sizes = [8, 256], strides = [1, 1]} : vector<64x256xf32> to vector<8x256xf32>
    %cst_22 = arith.constant dense<0.000000e+00> : vector<8x512xf32>
    %144 = tpu.matmul %142, %6, %cst_22 {dimension_numbers = #tpu.dot_dimension_numbers<[1], [0], [0], [1], [0, 0, 1, 1], [], []>} : vector<8x64xbf16>, vector<64x512xbf16>, vector<8x512xf32> -> vector<8x512xf32>
    %145 = vector.extract_strided_slice %144 {offsets = [0, 0], sizes = [8, 256], strides = [1, 1]} : vector<8x512xf32> to vector<8x256xf32>
    %146 = arith.addf %143, %145 : vector<8x256xf32>
    %147 = vector.extract_strided_slice %144 {offsets = [0, 256], sizes = [8, 128], strides = [1, 1]} : vector<8x512xf32> to vector<8x128xf32>
    %148 = vector.extract_strided_slice %144 {offsets = [0, 384], sizes = [8, 128], strides = [1, 1]} : vector<8x512xf32> to vector<8x128xf32>
    %149 = vector.extract_strided_slice %146 {offsets = [0, 0], sizes = [8, 128], strides = [1, 1]} : vector<8x256xf32> to vector<8x128xf32>
    %150 = arith.negf %149 : vector<8x128xf32>
    %151 = math.exp %150 : vector<8x128xf32>
    %cst_23 = arith.constant 1.000000e+00 : f32
    %152 = vector.broadcast %cst_23 : f32 to vector<8x128xf32>
    %153 = arith.addf %152, %151 : vector<8x128xf32>
    %154 = arith.divf %152, %153 : vector<8x128xf32>
    %155 = vector.extract_strided_slice %154 {offsets = [0, 0], sizes = [8, 64], strides = [1, 1]} : vector<8x128xf32> to vector<8x64xf32>
    %156 = vector.extract_strided_slice %154 {offsets = [0, 64], sizes = [8, 64], strides = [1, 1]} : vector<8x128xf32> to vector<8x64xf32>
    %157 = vector.extract_strided_slice %146 {offsets = [0, 128], sizes = [8, 64], strides = [1, 1]} : vector<8x256xf32> to vector<8x64xf32>
    %158 = math.tanh %157 : vector<8x64xf32>
    %159 = vector.extract_strided_slice %146 {offsets = [0, 192], sizes = [8, 64], strides = [1, 1]} : vector<8x256xf32> to vector<8x64xf32>
    %160 = arith.negf %159 : vector<8x64xf32>
    %161 = math.exp %160 : vector<8x64xf32>
    %cst_24 = arith.constant 1.000000e+00 : f32
    %162 = vector.broadcast %cst_24 : f32 to vector<8x64xf32>
    %163 = arith.addf %162, %161 : vector<8x64xf32>
    %164 = arith.divf %162, %163 : vector<8x64xf32>
    %165 = arith.mulf %156, %139 : vector<8x64xf32>
    %166 = arith.mulf %155, %158 : vector<8x64xf32>
    %167 = arith.addf %165, %166 : vector<8x64xf32>
    %168 = math.tanh %167 : vector<8x64xf32>
    %169 = arith.mulf %164, %168 : vector<8x64xf32>
    %170 = arith.truncf %169 : vector<8x64xf32> to vector<8x64xbf16>
    %171 = vector.extract_strided_slice %5 {offsets = [48, 0], sizes = [8, 256], strides = [1, 1]} : vector<64x256xf32> to vector<8x256xf32>
    %cst_25 = arith.constant dense<0.000000e+00> : vector<8x512xf32>
    %172 = tpu.matmul %170, %6, %cst_25 {dimension_numbers = #tpu.dot_dimension_numbers<[1], [0], [0], [1], [0, 0, 1, 1], [], []>} : vector<8x64xbf16>, vector<64x512xbf16>, vector<8x512xf32> -> vector<8x512xf32>
    %173 = vector.extract_strided_slice %172 {offsets = [0, 0], sizes = [8, 256], strides = [1, 1]} : vector<8x512xf32> to vector<8x256xf32>
    %174 = arith.addf %171, %173 : vector<8x256xf32>
    %175 = vector.extract_strided_slice %172 {offsets = [0, 256], sizes = [8, 128], strides = [1, 1]} : vector<8x512xf32> to vector<8x128xf32>
    %176 = vector.extract_strided_slice %172 {offsets = [0, 384], sizes = [8, 128], strides = [1, 1]} : vector<8x512xf32> to vector<8x128xf32>
    %177 = vector.extract_strided_slice %174 {offsets = [0, 0], sizes = [8, 128], strides = [1, 1]} : vector<8x256xf32> to vector<8x128xf32>
    %178 = arith.negf %177 : vector<8x128xf32>
    %179 = math.exp %178 : vector<8x128xf32>
    %cst_26 = arith.constant 1.000000e+00 : f32
    %180 = vector.broadcast %cst_26 : f32 to vector<8x128xf32>
    %181 = arith.addf %180, %179 : vector<8x128xf32>
    %182 = arith.divf %180, %181 : vector<8x128xf32>
    %183 = vector.extract_strided_slice %182 {offsets = [0, 0], sizes = [8, 64], strides = [1, 1]} : vector<8x128xf32> to vector<8x64xf32>
    %184 = vector.extract_strided_slice %182 {offsets = [0, 64], sizes = [8, 64], strides = [1, 1]} : vector<8x128xf32> to vector<8x64xf32>
    %185 = vector.extract_strided_slice %174 {offsets = [0, 128], sizes = [8, 64], strides = [1, 1]} : vector<8x256xf32> to vector<8x64xf32>
    %186 = math.tanh %185 : vector<8x64xf32>
    %187 = vector.extract_strided_slice %174 {offsets = [0, 192], sizes = [8, 64], strides = [1, 1]} : vector<8x256xf32> to vector<8x64xf32>
    %188 = arith.negf %187 : vector<8x64xf32>
    %189 = math.exp %188 : vector<8x64xf32>
    %cst_27 = arith.constant 1.000000e+00 : f32
    %190 = vector.broadcast %cst_27 : f32 to vector<8x64xf32>
    %191 = arith.addf %190, %189 : vector<8x64xf32>
    %192 = arith.divf %190, %191 : vector<8x64xf32>
    %193 = arith.mulf %184, %167 : vector<8x64xf32>
    %194 = arith.mulf %183, %186 : vector<8x64xf32>
    %195 = arith.addf %193, %194 : vector<8x64xf32>
    %196 = math.tanh %195 : vector<8x64xf32>
    %197 = arith.mulf %192, %196 : vector<8x64xf32>
    %198 = arith.truncf %197 : vector<8x64xf32> to vector<8x64xbf16>
    %199 = vector.extract_strided_slice %5 {offsets = [56, 0], sizes = [8, 256], strides = [1, 1]} : vector<64x256xf32> to vector<8x256xf32>
    %cst_28 = arith.constant dense<0.000000e+00> : vector<8x512xf32>
    %200 = tpu.matmul %198, %6, %cst_28 {dimension_numbers = #tpu.dot_dimension_numbers<[1], [0], [0], [1], [0, 0, 1, 1], [], []>} : vector<8x64xbf16>, vector<64x512xbf16>, vector<8x512xf32> -> vector<8x512xf32>
    %201 = vector.extract_strided_slice %200 {offsets = [0, 0], sizes = [8, 256], strides = [1, 1]} : vector<8x512xf32> to vector<8x256xf32>
    %202 = arith.addf %199, %201 : vector<8x256xf32>
    %203 = vector.extract_strided_slice %200 {offsets = [0, 256], sizes = [8, 128], strides = [1, 1]} : vector<8x512xf32> to vector<8x128xf32>
    %204 = vector.extract_strided_slice %200 {offsets = [0, 384], sizes = [8, 128], strides = [1, 1]} : vector<8x512xf32> to vector<8x128xf32>
    %205 = vector.extract_strided_slice %202 {offsets = [0, 0], sizes = [8, 128], strides = [1, 1]} : vector<8x256xf32> to vector<8x128xf32>
    %206 = arith.negf %205 : vector<8x128xf32>
    %207 = math.exp %206 : vector<8x128xf32>
    %cst_29 = arith.constant 1.000000e+00 : f32
    %208 = vector.broadcast %cst_29 : f32 to vector<8x128xf32>
    %209 = arith.addf %208, %207 : vector<8x128xf32>
    %210 = arith.divf %208, %209 : vector<8x128xf32>
    %211 = vector.extract_strided_slice %210 {offsets = [0, 0], sizes = [8, 64], strides = [1, 1]} : vector<8x128xf32> to vector<8x64xf32>
    %212 = vector.extract_strided_slice %210 {offsets = [0, 64], sizes = [8, 64], strides = [1, 1]} : vector<8x128xf32> to vector<8x64xf32>
    %213 = vector.extract_strided_slice %202 {offsets = [0, 128], sizes = [8, 64], strides = [1, 1]} : vector<8x256xf32> to vector<8x64xf32>
    %214 = math.tanh %213 : vector<8x64xf32>
    %215 = vector.extract_strided_slice %202 {offsets = [0, 192], sizes = [8, 64], strides = [1, 1]} : vector<8x256xf32> to vector<8x64xf32>
    %216 = arith.negf %215 : vector<8x64xf32>
    %217 = math.exp %216 : vector<8x64xf32>
    %cst_30 = arith.constant 1.000000e+00 : f32
    %218 = vector.broadcast %cst_30 : f32 to vector<8x64xf32>
    %219 = arith.addf %218, %217 : vector<8x64xf32>
    %220 = arith.divf %218, %219 : vector<8x64xf32>
    %221 = arith.mulf %212, %195 : vector<8x64xf32>
    %222 = arith.mulf %211, %214 : vector<8x64xf32>
    %223 = arith.addf %221, %222 : vector<8x64xf32>
    %224 = math.tanh %223 : vector<8x64xf32>
    %225 = arith.mulf %220, %224 : vector<8x64xf32>
    %226 = arith.truncf %225 : vector<8x64xf32> to vector<8x64xbf16>
    %227 = vector.extract_strided_slice %6 {offsets = [0, 256], sizes = [64, 256], strides = [1, 1]} : vector<64x512xbf16> to vector<64x256xbf16>
    %cst_31 = arith.constant dense<0.000000e+00> : vector<8x256xf32>
    %228 = tpu.matmul %226, %227, %cst_31 {dimension_numbers = #tpu.dot_dimension_numbers<[1], [0], [0], [1], [0, 0, 1, 1], [], []>} : vector<8x64xbf16>, vector<64x256xbf16>, vector<8x256xf32> -> vector<8x256xf32>
    %229 = vector.extract_strided_slice %228 {offsets = [0, 0], sizes = [8, 128], strides = [1, 1]} : vector<8x256xf32> to vector<8x128xf32>
    %230 = vector.extract_strided_slice %228 {offsets = [0, 128], sizes = [8, 128], strides = [1, 1]} : vector<8x256xf32> to vector<8x128xf32>
    %231 = tpu.concatenate %35, %63, %91, %119, %147, %175, %203, %229 in 0 : vector<8x128xf32>, vector<8x128xf32>, vector<8x128xf32>, vector<8x128xf32>, vector<8x128xf32>, vector<8x128xf32>, vector<8x128xf32>, vector<8x128xf32> -> vector<64x128xf32>
    %232 = tpu.concatenate %230, %204, %176, %148, %120, %92, %64, %36 in 0 : vector<8x128xf32>, vector<8x128xf32>, vector<8x128xf32>, vector<8x128xf32>, vector<8x128xf32>, vector<8x128xf32>, vector<8x128xf32>, vector<8x128xf32> -> vector<64x128xf32>
    %233 = arith.addf %231, %232 : vector<64x128xf32>
    %c0_32 = arith.constant 0 : index
    %c0_33 = arith.constant 0 : index
    %234 = vector.load %arg5[%c0_32, %c0_33] : memref<1x128xf32, #tpu.memory_space<vmem>>, vector<1x128xf32>
    %235 = vector.broadcast %234 : vector<1x128xf32> to vector<64x128xf32>
    %236 = arith.addf %233, %235 : vector<64x128xf32>
    %cst_34 = arith.constant 0.000000e+00 : f32
    %237 = vector.broadcast %cst_34 : f32 to vector<64x128xf32>
    %238 = arith.maximumf %236, %237 : vector<64x128xf32>
    %c0_35 = arith.constant 0 : index
    %c0_36 = arith.constant 0 : index
    %239 = vector.load %arg6[%c0_35, %c0_36] : memref<128x32xf32, #tpu.memory_space<vmem>>, vector<128x32xf32>
    %cst_37 = arith.constant dense<0.000000e+00> : vector<64x32xf32>
    %240 = tpu.matmul %238, %239, %cst_37 {dimension_numbers = #tpu.dot_dimension_numbers<[1], [0], [0], [1], [0, 0, 1, 1], [], []>} : vector<64x128xf32>, vector<128x32xf32>, vector<64x32xf32> -> vector<64x32xf32>
    %c0_38 = arith.constant 0 : index
    %c0_39 = arith.constant 0 : index
    %241 = vector.load %arg7[%c0_38, %c0_39] : memref<1x32xf32, #tpu.memory_space<vmem>>, vector<1x32xf32>
    %242 = vector.broadcast %241 : vector<1x32xf32> to vector<64x32xf32>
    %243 = arith.addf %240, %242 : vector<64x32xf32>
    %c0_40 = arith.constant 0 : index
    %c0_41 = arith.constant 0 : index
    %244 = vector.load %arg0[%c0_40, %c0_41] : memref<64x32xf32, #tpu.memory_space<vmem>>, vector<64x32xf32>
    %245 = arith.addf %244, %243 : vector<64x32xf32>
    %c0_42 = arith.constant 0 : index
    %c0_43 = arith.constant 0 : index
    %246 = vector.load %arg8[%c0_42, %c0_43] : memref<64x32xf32, #tpu.memory_space<vmem>>, vector<64x32xf32>
    tpu.vector_store %arg8[%c0_42, %c0_43], %245 {strides = array<i32>} : memref<64x32xf32, #tpu.memory_space<vmem>>, vector<64x32xf32>,
    return
  }
}

</mosaic_0001>

<llo_original>
// kernel: tpu_custom_call.1
$region0: #{tpu_custom_call.1}
  #allocation0 [shape = 'u32[]', space=smem, size = 0x4, offset = 0x4, fixed_abs, tag = 'smem constant byte address 0x4 - core index']
  #allocation1 [shape = 'u32[72,128]{1,0:T(1,128)}', space=vmem, size = 0x9000, scoped, tag = 'internal scratch']
  %s0 = inlined_call_operand.vmem [shape: f32[64,32], index: 0, kind: input, shape index: {}]
  %s1 = inlined_call_operand.vmem [shape: f32[64,64], index: 1, kind: input, shape index: {}]
  %s2 = inlined_call_operand.vmem [shape: f32[64,256], index: 2, kind: input, shape index: {}]
  %s3 = inlined_call_operand.vmem [shape: f32[1,256], index: 3, kind: input, shape index: {}]
  %s4 = inlined_call_operand.hbm [shape: bf16[64,512], index: 4, kind: input, shape index: {}]
  %s5 = inlined_call_operand.vmem [shape: f32[1,128], index: 5, kind: input, shape index: {}]
  %s6 = inlined_call_operand.vmem [shape: f32[128,32], index: 6, kind: input, shape index: {}]
  %s7 = inlined_call_operand.vmem [shape: f32[1,32], index: 7, kind: input, shape index: {}]
  %s8 = inlined_call_operand.vmem [shape: f32[64,32], index: 8, kind: output, shape index: {}]
  %s9 = sld [smem:[#allocation0]]
  $region46: #{tpu_custom_call.1} parent=0
    _
  %s11 = ssub.s32 1, %s9
  %s12 = scalar_select 0, %s11, %s9
  $region1: #{tpu_custom_call.1} parent=0
    #allocation2 [shape = 'u8[65536]{0}', space=vmem, size = 0x10000, scoped, tag = 'input window, operand 4, single buffered']
    #allocation3 [shape = 's32[1]{0}', space=sflag, size = 0x4, scoped, tag = 'scoped memory for tpu_custom_call.1']
    %13 = vsyncpa [#allocation3], 0
    // Predicated region
    $region2: #{tpu_custom_call.1} parent=1 // pred_check
      _
    $region3: #{tpu_custom_call.1} parent=1 // pred_check_branch
      %15 = sbr.rel (0) target = $region5
    $region4: #{tpu_custom_call.1} parent=1 // pred_region
      _
    $region5: #{tpu_custom_call.1} parent=1 // pred_fallthru
      _
    // Predicated region
    $region6: #{tpu_custom_call.1} parent=1 // pred_check
      _
    $region7: #{tpu_custom_call.1} parent=1 // pred_check_branch
      %17 = sbr.rel (0) target = $region9
    $region8: #{tpu_custom_call.1} parent=1 // pred_region
      _
    $region9: #{tpu_custom_call.1} parent=1 // pred_fallthru
      _
    // Predicated region
    $region10: #{tpu_custom_call.1} parent=1 // pred_check
      _
    $region11: #{tpu_custom_call.1} parent=1 // pred_check_branch
      %19 = sbr.rel (0) target = $region13
    $region12: #{tpu_custom_call.1} parent=1 // pred_region
      _
    $region13: #{tpu_custom_call.1} parent=1 // pred_fallthru
      _
    // Predicated region
    $region14: #{tpu_custom_call.1} parent=1 // pred_check
      _
    $region15: #{tpu_custom_call.1} parent=1 // pred_check_branch
      %21 = sbr.rel (0) target = $region17
    $region16: #{tpu_custom_call.1} parent=1 // pred_region
      _
    $region17: #{tpu_custom_call.1} parent=1 // pred_fallthru
      _
    // Predicated region
    $region18: #{tpu_custom_call.1} parent=1 // pred_check
      _
    $region19: #{tpu_custom_call.1} parent=1 // pred_check_branch
      %23 = sbr.rel (0) target = $region21
    $region20: #{tpu_custom_call.1} parent=1 // pred_region
      %25 = vsyncadd [#allocation3], 0
      %s26 = sshll.u32 %s4, 4
      %s27 = int_to_ptr.hbm [resolvable:$true] %s26
      %s28 = sshll.u32 [#allocation2], 4
      %s29 = int_to_ptr.vmem [resolvable:$true] %s28
      %34 = dma.hbm_to_vmem [thread:$0]  %s27, 2048, %s29, [#allocation3], 256, 256, 16
    $region21: #{tpu_custom_call.1} parent=1 // pred_fallthru
      _
    // Predicated region
    $region22: #{tpu_custom_call.1} parent=1 // pred_check
      _
    $region23: #{tpu_custom_call.1} parent=1 // pred_check_branch
      %36 = sbr.rel (0) target = $region25
    $region24: #{tpu_custom_call.1} parent=1 // pred_region
      _
    $region25: #{tpu_custom_call.1} parent=1 // pred_fallthru
      _
    // Predicated region
    $region26: #{tpu_custom_call.1} parent=1 // pred_check
      _
    $region27: #{tpu_custom_call.1} parent=1 // pred_check_branch
      %38 = sbr.rel (0) target = $region29
    $region28: #{tpu_custom_call.1} parent=1 // pred_region
      _
    $region29: #{tpu_custom_call.1} parent=1 // pred_fallthru
      _
    // Predicated region
    $region30: #{tpu_custom_call.1} parent=1 // pred_check
      _
    $region31: #{tpu_custom_call.1} parent=1 // pred_check_branch
      %40 = sbr.rel (0) target = $region33
    $region32: #{tpu_custom_call.1} parent=1 // pred_region
      _
    $region33: #{tpu_custom_call.1} parent=1 // pred_fallthru
      _
    // Predicated region
    $region34: #{tpu_custom_call.1} parent=1 // pred_check
      _
    $region35: #{tpu_custom_call.1} parent=1 // pred_check_branch
      %42 = sbr.rel (0) target = $region37
    $region36: #{tpu_custom_call.1} parent=1 // pred_region
      %44 = dma.done [#allocation3], 2048
    $region37: #{tpu_custom_call.1} parent=1 // pred_fallthru
      _
    %v46 = vld [vmem:[%s1] sm:$0xff]
    %v47 = vld [vmem:[%s1 + $0x8] sm:$0xff]
    %v48 = vld [vmem:[%s1 + $0x10] sm:$0xff]
    %v49 = vld [vmem:[%s1 + $0x18] sm:$0xff]
    %v50 = vld [vmem:[%s1 + $0x20] sm:$0xff]
    %v51 = vld [vmem:[%s1 + $0x28] sm:$0xff]
    %v52 = vld [vmem:[%s1 + $0x30] sm:$0xff]
    %v53 = vld [vmem:[%s1 + $0x38] sm:$0xff]
    %v54 = vld [vmem:[%s2] sm:$0xff]
    %v55 = vld [vmem:[%s2 + $0x8] sm:$0xff]
    %v56 = vld [vmem:[%s2 + $0x10] sm:$0xff]
    %v57 = vld [vmem:[%s2 + $0x18] sm:$0xff]
    %v58 = vld [vmem:[%s2 + $0x20] sm:$0xff]
    %v59 = vld [vmem:[%s2 + $0x28] sm:$0xff]
    %v60 = vld [vmem:[%s2 + $0x30] sm:$0xff]
    %v61 = vld [vmem:[%s2 + $0x38] sm:$0xff]
    %v62 = vld [vmem:[%s2 + $0x40] sm:$0xff]
    %v63 = vld [vmem:[%s2 + $0x48] sm:$0xff]
    %v64 = vld [vmem:[%s2 + $0x50] sm:$0xff]
    %v65 = vld [vmem:[%s2 + $0x58] sm:$0xff]
    %v66 = vld [vmem:[%s2 + $0x60] sm:$0xff]
    %v67 = vld [vmem:[%s2 + $0x68] sm:$0xff]
    %v68 = vld [vmem:[%s2 + $0x70] sm:$0xff]
    %v69 = vld [vmem:[%s2 + $0x78] sm:$0xff]
    %v70 = vld [vmem:[%s3] sm:$0x3]
    %v72 = vperm.slane %v70, 0
    %v73 = vperm.slane %v70, 1
    %vm76 = vcmask 523264
    %v78 = vsel %vm76, %v46, 0
    %v81 = vsel %vm76, %v47, 0
    %v84 = vsel %vm76, %v48, 0
    %v87 = vsel %vm76, %v49, 0
    %v90 = vsel %vm76, %v50, 0
    %v93 = vsel %vm76, %v51, 0
    %v96 = vsel %vm76, %v52, 0
    %v99 = vsel %vm76, %v53, 0
    %101 = vmatpush.msra.mxu0 0.0
    %102 = vmatpush.msra.mxu0 0.0
    %103 = vmatpush.msra.mxu0 0.0
    %104 = vmatpush.msra.mxu0 0.0
    %105 = vmatpush.msra.mxu0 0.0
    %106 = vmatpush.msra.mxu0 0.0
    %107 = vmatpush.msra.mxu0 0.0
    %108 = vmatpush.msra.mxu0 0.0
    %109 = vmatpush.msra.mxu0 %v68
    %110 = vmatpush.msra.mxu0 %v66
    %111 = vmatpush.msra.mxu0 %v64
    %112 = vmatpush.msra.mxu0 %v62
    %113 = vmatpush.msra.mxu0 %v60
    %114 = vmatpush.msra.mxu0 %v58
    %115 = vmatpush.msra.mxu0 %v56
    %116 = vmatpush.msra.mxu0 %v54
    %117 = vmatmul.f32.gmra.mxu0 %v78
    %v118 = vpop.f32.mrf.mxu0
    %v119 = vadd.f32 %v72, %v118
    %120 = vmatmul.f32.gmra.mxu0 %v81
    %v121 = vpop.f32.mrf.mxu0
    %v122 = vadd.f32 %v72, %v121
    %123 = vmatmul.f32.gmra.mxu0 %v84
    %v124 = vpop.f32.mrf.mxu0
    %v125 = vadd.f32 %v72, %v124
    %126 = vmatmul.f32.gmra.mxu0 %v87
    %v127 = vpop.f32.mrf.mxu0
    %v128 = vadd.f32 %v72, %v127
    %129 = vmatmul.f32.gmra.mxu0 %v90
    %v130 = vpop.f32.mrf.mxu0
    %v131 = vadd.f32 %v72, %v130
    %132 = vmatmul.f32.gmra.mxu0 %v93
    %v133 = vpop.f32.mrf.mxu0
    %v134 = vadd.f32 %v72, %v133
    %135 = vmatmul.f32.gmra.mxu0 %v96
    %v136 = vpop.f32.mrf.mxu0
    %v137 = vadd.f32 %v72, %v136
    %138 = vmatmul.f32.gmra.mxu0 %v99
    %v139 = vpop.f32.mrf.mxu0
    %v140 = vadd.f32 %v72, %v139
    %141 = vdwg.mxu0
    %142 = vmatpush.msra.mxu0 0.0
    %143 = vmatpush.msra.mxu0 0.0
    %144 = vmatpush.msra.mxu0 0.0
    %145 = vmatpush.msra.mxu0 0.0
    %146 = vmatpush.msra.mxu0 0.0
    %147 = vmatpush.msra.mxu0 0.0
    %148 = vmatpush.msra.mxu0 0.0
    %149 = vmatpush.msra.mxu0 0.0
    %150 = vmatpush.msra.mxu0 %v69
    %151 = vmatpush.msra.mxu0 %v67
    %152 = vmatpush.msra.mxu0 %v65
    %153 = vmatpush.msra.mxu0 %v63
    %154 = vmatpush.msra.mxu0 %v61
    %155 = vmatpush.msra.mxu0 %v59
    %156 = vmatpush.msra.mxu0 %v57
    %157 = vmatpush.msra.mxu0 %v55
    %158 = vmatmul.f32.gmra.mxu0 %v78
    %v159 = vpop.f32.mrf.mxu0
    %v160 = vadd.f32 %v73, %v159
    %161 = vmatmul.f32.gmra.mxu0 %v81
    %v162 = vpop.f32.mrf.mxu0
    %v163 = vadd.f32 %v73, %v162
    %164 = vmatmul.f32.gmra.mxu0 %v84
    %v165 = vpop.f32.mrf.mxu0
    %v166 = vadd.f32 %v73, %v165
    %167 = vmatmul.f32.gmra.mxu0 %v87
    %v168 = vpop.f32.mrf.mxu0
    %v169 = vadd.f32 %v73, %v168
    %170 = vmatmul.f32.gmra.mxu0 %v90
    %v171 = vpop.f32.mrf.mxu0
    %v172 = vadd.f32 %v73, %v171
    %173 = vmatmul.f32.gmra.mxu0 %v93
    %v174 = vpop.f32.mrf.mxu0
    %v175 = vadd.f32 %v73, %v174
    %176 = vmatmul.f32.gmra.mxu0 %v96
    %v177 = vpop.f32.mrf.mxu0
    %v178 = vadd.f32 %v73, %v177
    %179 = vmatmul.f32.gmra.mxu0 %v99
    %v180 = vpop.f32.mrf.mxu0
    %v181 = vadd.f32 %v73, %v180
    %182 = vdwg.mxu0
    %v183 = vld [vmem:[#allocation2] sm:$0xff]
    %v184 = vld [vmem:[#allocation2 + $0x8] sm:$0xff]
    %v185 = vld [vmem:[#allocation2 + $0x10] sm:$0xff]
    %v186 = vld [vmem:[#allocation2 + $0x18] sm:$0xff]
    %v187 = vld [vmem:[#allocation2 + $0x20] sm:$0xff]
    %v188 = vld [vmem:[#allocation2 + $0x28] sm:$0xff]
    %v189 = vld [vmem:[#allocation2 + $0x30] sm:$0xff]
    %v190 = vld [vmem:[#allocation2 + $0x38] sm:$0xff]
    %v191 = vld [vmem:[#allocation2 + $0x40] sm:$0xff]
    %v192 = vld [vmem:[#allocation2 + $0x48] sm:$0xff]
    %v193 = vld [vmem:[#allocation2 + $0x50] sm:$0xff]
    %v194 = vld [vmem:[#allocation2 + $0x58] sm:$0xff]
    %v195 = vld [vmem:[#allocation2 + $0x60] sm:$0xff]
    %v196 = vld [vmem:[#allocation2 + $0x68] sm:$0xff]
    %v197 = vld [vmem:[#allocation2 + $0x70] sm:$0xff]
    %v198 = vld [vmem:[#allocation2 + $0x78] sm:$0xff]
    %v199 = vxor.u32 %v119, 2147483648
    %v200 = vmul.f32 %v199, 1.442695
    %v201 = vpow.pop %v200
    %v202 = vadd.f32 %v201, 1.0
    %v203 = vrcp.pop %v202
    %v204 = vmul.f32 %v202, %v203
    %v205 = vsub.f32 1.0, %v204
    %v206 = vmul.f32 %v203, %v205
    %v207 = vadd.f32 %v203, %v206
    %vm208 = vweird.f32 %v202
    %vm209 = vweird.f32 %v203
    %vm210 = vmor %vm208, %vm209
    %v211 = vsel %vm210, %v203, %v207
    %v212 = vand.u32 2147483647, %v202
    %vm213 = vcmp.eq.f32.partialorder %v212, 8.507059e+37
    %v214 = vand.u32 %v202, 2147483648
    %v215 = vor.u32 1.1754944e-38, %v214
    %v216 = vsel %vm213, %v215, %v211
    %v217 = vmul.f32 1.0, %v216
    %v218 = vtanh.pop %v160
    %v219 = vxor.u32 %v160, 2147483648
    %v220 = vmul.f32 %v219, 1.442695
    %v221 = vpow.pop %v220
    %v222 = vadd.f32 %v221, 1.0
    %v223 = vrcp.pop %v222
    %v224 = vmul.f32 %v222, %v223
    %v225 = vsub.f32 1.0, %v224
    %v226 = vmul.f32 %v223, %v225
    %v227 = vadd.f32 %v223, %v226
    %vm228 = vweird.f32 %v222
    %vm229 = vweird.f32 %v223
    %vm230 = vmor %vm228, %vm229
    %v231 = vsel %vm230, %v223, %v227
    %v232 = vand.u32 2147483647, %v222
    %vm233 = vcmp.eq.f32.partialorder %v232, 8.507059e+37
    %v234 = vand.u32 %v222, 2147483648
    %v235 = vor.u32 1.1754944e-38, %v234
    %v236 = vsel %vm233, %v235, %v231
    %v237 = vmul.f32 1.0, %v236
    %v238 = vmul.f32 %v217, 0.0
    %v239 = vmul.f32 %v217, %v218
    %241 = vrot.lane.b32.xlu0 %v239, 64
    %v242 = vpop.permute.xlu0 %241
    %v244 = vadd.f32 %v238, %v242
    %v245 = vtanh.pop %v244
    %v246 = vmul.f32 %v237, %v245
    %v247 = vpack.c.bf16 %v246, %v246
    %249 = vrot.lane.b32.xlu0 %v247, 64
    %v250 = vpop.permute.xlu0 %249
    %v267 = vunpack.c.l.b16 %v183
    %v268 = vunpack.c.h.b16 %v183
    %v269 = vunpack.c.l.b16 %v184
    %v270 = vunpack.c.h.b16 %v184
    %v271 = vunpack.c.l.b16 %v185
    %v272 = vunpack.c.h.b16 %v185
    %v273 = vunpack.c.l.b16 %v186
    %v274 = vunpack.c.h.b16 %v186
    %v275 = vunpack.c.l.b16 %v187
    %v276 = vunpack.c.h.b16 %v187
    %v277 = vunpack.c.l.b16 %v188
    %v278 = vunpack.c.h.b16 %v188
    %v279 = vunpack.c.l.b16 %v189
    %v280 = vunpack.c.h.b16 %v189
    %v281 = vunpack.c.l.b16 %v190
    %v282 = vunpack.c.h.b16 %v190
    %v283 = vunpack.c.l.b16 %v191
    %v284 = vunpack.c.h.b16 %v191
    %v285 = vunpack.c.l.b16 %v192
    %v286 = vunpack.c.h.b16 %v192
    %v287 = vunpack.c.l.b16 %v193
    %v288 = vunpack.c.h.b16 %v193
    %v289 = vunpack.c.l.b16 %v194
    %v290 = vunpack.c.h.b16 %v194
    %v291 = vunpack.c.l.b16 %v195
    %v292 = vunpack.c.h.b16 %v195
    %v293 = vunpack.c.l.b16 %v196
    %v294 = vunpack.c.h.b16 %v196
    %v295 = vunpack.c.l.b16 %v197
    %v296 = vunpack.c.h.b16 %v197
    %v297 = vunpack.c.l.b16 %v198
    %v298 = vunpack.c.h.b16 %v198
    %v299 = vpack.c.b16 %v271, %v267
    %v300 = vpack.c.b16 %v272, %v268
    %v301 = vpack.c.b16 %v273, %v269
    %v302 = vpack.c.b16 %v274, %v270
    %v303 = vpack.c.b16 %v279, %v275
    %v304 = vpack.c.b16 %v280, %v276
    %v305 = vpack.c.b16 %v281, %v277
    %v306 = vpack.c.b16 %v282, %v278
    %v307 = vpack.c.b16 %v287, %v283
    %v308 = vpack.c.b16 %v288, %v284
    %v309 = vpack.c.b16 %v289, %v285
    %v310 = vpack.c.b16 %v290, %v286
    %v311 = vpack.c.b16 %v295, %v291
    %v312 = vpack.c.b16 %v296, %v292
    %v313 = vpack.c.b16 %v297, %v293
    %v314 = vpack.c.b16 %v298, %v294
    %v332 = vsel %vm76, %v250, 0
    %334 = vmatpush.bf16.msra.mxu0 0
    %335 = vmatpush.bf16.msra.mxu0 0
    %336 = vmatpush.bf16.msra.mxu0 0
    %337 = vmatpush.bf16.msra.mxu0 0
    %338 = vmatpush.bf16.msra.mxu0 %v311
    %339 = vmatpush.bf16.msra.mxu0 %v307
    %340 = vmatpush.bf16.msra.mxu0 %v303
    %341 = vmatpush.bf16.msra.mxu0 %v299
    %342 = vmatmul.bf16.gmra.mxu0 %v332
    %v343 = vpop.f32.mrf.mxu0
    %v344 = vadd.f32 0.0, %v343
    %v345 = vpop.f32.mrf.mxu0
    %346 = vdwg.mxu0
    %347 = vmatpush.bf16.msra.mxu0 0
    %348 = vmatpush.bf16.msra.mxu0 0
    %349 = vmatpush.bf16.msra.mxu0 0
    %350 = vmatpush.bf16.msra.mxu0 0
    %351 = vmatpush.bf16.msra.mxu0 %v312
    %352 = vmatpush.bf16.msra.mxu0 %v308
    %353 = vmatpush.bf16.msra.mxu0 %v304
    %354 = vmatpush.bf16.msra.mxu0 %v300
    %355 = vmatmul.bf16.gmra.mxu0 %v332
    %v356 = vpop.f32.mrf.mxu0
    %v357 = vadd.f32 0.0, %v356
    %v358 = vpop.f32.mrf.mxu0
    %359 = vdwg.mxu0
    %360 = vmatpush.bf16.msra.mxu0 0
    %361 = vmatpush.bf16.msra.mxu0 0
    %362 = vmatpush.bf16.msra.mxu0 0
    %363 = vmatpush.bf16.msra.mxu0 0
    %364 = vmatpush.bf16.msra.mxu0 %v313
    %365 = vmatpush.bf16.msra.mxu0 %v309
    %366 = vmatpush.bf16.msra.mxu0 %v305
    %367 = vmatpush.bf16.msra.mxu0 %v301
    %368 = vmatmul.bf16.gmra.mxu0 %v332
    %v369 = vpop.f32.mrf.mxu0
    %v370 = vadd.f32 0.0, %v369
    %v371 = vpop.f32.mrf.mxu0
    %372 = vdwg.mxu0
    %373 = vmatpush.bf16.msra.mxu0 0
    %374 = vmatpush.bf16.msra.mxu0 0
    %375 = vmatpush.bf16.msra.mxu0 0
    %376 = vmatpush.bf16.msra.mxu0 0
    %377 = vmatpush.bf16.msra.mxu0 %v314
    %378 = vmatpush.bf16.msra.mxu0 %v310
    %379 = vmatpush.bf16.msra.mxu0 %v306
    %380 = vmatpush.bf16.msra.mxu0 %v302
    %381 = vmatmul.bf16.gmra.mxu0 %v332
    %v382 = vpop.f32.mrf.mxu0
    %v383 = vadd.f32 0.0, %v382
    %v384 = vpop.f32.mrf.mxu0
    %385 = vdwg.mxu0
    %v386 = vadd.f32 %v122, %v344
    %v387 = vadd.f32 %v163, %v357
    %v388 = vxor.u32 %v386, 2147483648
    %v389 = vmul.f32 %v388, 1.442695
    %v390 = vpow.pop %v389
    %v391 = vadd.f32 %v390, 1.0
    %v392 = vrcp.pop %v391
    %v393 = vmul.f32 %v391, %v392
    %v394 = vsub.f32 1.0, %v393
    %v395 = vmul.f32 %v392, %v394
    %v396 = vadd.f32 %v392, %v395
    %vm397 = vweird.f32 %v391
    %vm398 = vweird.f32 %v392
    %vm399 = vmor %vm397, %vm398
    %v400 = vsel %vm399, %v392, %v396
    %v401 = vand.u32 2147483647, %v391
    %vm402 = vcmp.eq.f32.partialorder %v401, 8.507059e+37
    %v403 = vand.u32 %v391, 2147483648
    %v404 = vor.u32 1.1754944e-38, %v403
    %v405 = vsel %vm402, %v404, %v400
    %v406 = vmul.f32 1.0, %v405
    %v407 = vtanh.pop %v387
    %v408 = vxor.u32 %v387, 2147483648
    %v409 = vmul.f32 %v408, 1.442695
    %v410 = vpow.pop %v409
    %v411 = vadd.f32 %v410, 1.0
    %v412 = vrcp.pop %v411
    %v413 = vmul.f32 %v411, %v412
    %v414 = vsub.f32 1.0, %v413
    %v415 = vmul.f32 %v412, %v414
    %v416 = vadd.f32 %v412, %v415
    %vm417 = vweird.f32 %v411
    %vm418 = vweird.f32 %v412
    %vm419 = vmor %vm417, %vm418
    %v420 = vsel %vm419, %v412, %v416
    %v421 = vand.u32 2147483647, %v411
    %vm422 = vcmp.eq.f32.partialorder %v421, 8.507059e+37
    %v423 = vand.u32 %v411, 2147483648
    %v424 = vor.u32 1.1754944e-38, %v423
    %v425 = vsel %vm422, %v424, %v420
    %v426 = vmul.f32 1.0, %v425
    %v427 = vmul.f32 %v406, %v244
    %v428 = vmul.f32 %v406, %v407
    %430 = vrot.lane.b32.xlu0 %v428, 64
    %v431 = vpop.permute.xlu0 %430
    %v433 = vadd.f32 %v427, %v431
    %v434 = vtanh.pop %v433
    %v435 = vmul.f32 %v426, %v434
    %v436 = vpack.c.bf16 %v435, %v435
    %438 = vrot.lane.b32.xlu0 %v436, 64
    %v439 = vpop.permute.xlu0 %438
    %v441 = vsel %vm76, %v439, 0
    %443 = vmatpush.bf16.msra.mxu0 0
    %444 = vmatpush.bf16.msra.mxu0 0
    %445 = vmatpush.bf16.msra.mxu0 0
    %446 = vmatpush.bf16.msra.mxu0 0
    %447 = vmatpush.bf16.msra.mxu0 %v311
    %448 = vmatpush.bf16.msra.mxu0 %v307
    %449 = vmatpush.bf16.msra.mxu0 %v303
    %450 = vmatpush.bf16.msra.mxu0 %v299
    %451 = vmatmul.bf16.gmra.mxu0 %v441
    %v452 = vpop.f32.mrf.mxu0
    %v453 = vadd.f32 0.0, %v452
    %v454 = vpop.f32.mrf.mxu0
    %455 = vdwg.mxu0
    %456 = vmatpush.bf16.msra.mxu0 0
    %457 = vmatpush.bf16.msra.mxu0 0
    %458 = vmatpush.bf16.msra.mxu0 0
    %459 = vmatpush.bf16.msra.mxu0 0
    %460 = vmatpush.bf16.msra.mxu0 %v312
    %461 = vmatpush.bf16.msra.mxu0 %v308
    %462 = vmatpush.bf16.msra.mxu0 %v304
    %463 = vmatpush.bf16.msra.mxu0 %v300
    %464 = vmatmul.bf16.gmra.mxu0 %v441
    %v465 = vpop.f32.mrf.mxu0
    %v466 = vadd.f32 0.0, %v465
    %v467 = vpop.f32.mrf.mxu0
    %468 = vdwg.mxu0
    %469 = vmatpush.bf16.msra.mxu0 0
    %470 = vmatpush.bf16.msra.mxu0 0
    %471 = vmatpush.bf16.msra.mxu0 0
    %472 = vmatpush.bf16.msra.mxu0 0
    %473 = vmatpush.bf16.msra.mxu0 %v313
    %474 = vmatpush.bf16.msra.mxu0 %v309
    %475 = vmatpush.bf16.msra.mxu0 %v305
    %476 = vmatpush.bf16.msra.mxu0 %v301
    %477 = vmatmul.bf16.gmra.mxu0 %v441
    %v478 = vpop.f32.mrf.mxu0
    %v479 = vadd.f32 0.0, %v478
    %v480 = vpop.f32.mrf.mxu0
    %481 = vdwg.mxu0
    %482 = vmatpush.bf16.msra.mxu0 0
    %483 = vmatpush.bf16.msra.mxu0 0
    %484 = vmatpush.bf16.msra.mxu0 0
    %485 = vmatpush.bf16.msra.mxu0 0
    %486 = vmatpush.bf16.msra.mxu0 %v314
    %487 = vmatpush.bf16.msra.mxu0 %v310
    %488 = vmatpush.bf16.msra.mxu0 %v306
    %489 = vmatpush.bf16.msra.mxu0 %v302
    %490 = vmatmul.bf16.gmra.mxu0 %v441
    %v491 = vpop.f32.mrf.mxu0
    %v492 = vadd.f32 0.0, %v491
    %v493 = vpop.f32.mrf.mxu0
    %494 = vdwg.mxu0
    %v495 = vadd.f32 %v125, %v453
    %v496 = vadd.f32 %v166, %v466
    %v497 = vxor.u32 %v495, 2147483648
    %v498 = vmul.f32 %v497, 1.442695
    %v499 = vpow.pop %v498
    %v500 = vadd.f32 %v499, 1.0
    %v501 = vrcp.pop %v500
    %v502 = vmul.f32 %v500, %v501
    %v503 = vsub.f32 1.0, %v502
    %v504 = vmul.f32 %v501, %v503
    %v505 = vadd.f32 %v501, %v504
    %vm506 = vweird.f32 %v500
    %vm507 = vweird.f32 %v501
    %vm508 = vmor %vm506, %vm507
    %v509 = vsel %vm508, %v501, %v505
    %v510 = vand.u32 2147483647, %v500
    %vm511 = vcmp.eq.f32.partialorder %v510, 8.507059e+37
    %v512 = vand.u32 %v500, 2147483648
    %v513 = vor.u32 1.1754944e-38, %v512
    %v514 = vsel %vm511, %v513, %v509
    %v515 = vmul.f32 1.0, %v514
    %v516 = vtanh.pop %v496
    %v517 = vxor.u32 %v496, 2147483648
    %v518 = vmul.f32 %v517, 1.442695
    %v519 = vpow.pop %v518
    %v520 = vadd.f32 %v519, 1.0
    %v521 = vrcp.pop %v520
    %v522 = vmul.f32 %v520, %v521
    %v523 = vsub.f32 1.0, %v522
    %v524 = vmul.f32 %v521, %v523
    %v525 = vadd.f32 %v521, %v524
    %vm526 = vweird.f32 %v520
    %vm527 = vweird.f32 %v521
    %vm528 = vmor %vm526, %vm527
    %v529 = vsel %vm528, %v521, %v525
    %v530 = vand.u32 2147483647, %v520
    %vm531 = vcmp.eq.f32.partialorder %v530, 8.507059e+37
    %v532 = vand.u32 %v520, 2147483648
    %v533 = vor.u32 1.1754944e-38, %v532
    %v534 = vsel %vm531, %v533, %v529
    %v535 = vmul.f32 1.0, %v534
    %v536 = vmul.f32 %v515, %v433
    %v537 = vmul.f32 %v515, %v516
    %539 = vrot.lane.b32.xlu0 %v537, 64
    %v540 = vpop.permute.xlu0 %539
    %v542 = vadd.f32 %v536, %v540
    %v543 = vtanh.pop %v542
    %v544 = vmul.f32 %v535, %v543
    %v545 = vpack.c.bf16 %v544, %v544
    %547 = vrot.lane.b32.xlu0 %v545, 64
    %v548 = vpop.permute.xlu0 %547
    %v550 = vsel %vm76, %v548, 0
    %552 = vmatpush.bf16.msra.mxu0 0
    %553 = vmatpush.bf16.msra.mxu0 0
    %554 = vmatpush.bf16.msra.mxu0 0
    %555 = vmatpush.bf16.msra.mxu0 0
    %556 = vmatpush.bf16.msra.mxu0 %v311
    %557 = vmatpush.bf16.msra.mxu0 %v307
    %558 = vmatpush.bf16.msra.mxu0 %v303
    %559 = vmatpush.bf16.msra.mxu0 %v299
    %560 = vmatmul.bf16.gmra.mxu0 %v550
    %v561 = vpop.f32.mrf.mxu0
    %v562 = vadd.f32 0.0, %v561
    %v563 = vpop.f32.mrf.mxu0
    %564 = vdwg.mxu0
    %565 = vmatpush.bf16.msra.mxu0 0
    %566 = vmatpush.bf16.msra.mxu0 0
    %567 = vmatpush.bf16.msra.mxu0 0
    %568 = vmatpush.bf16.msra.mxu0 0
    %569 = vmatpush.bf16.msra.mxu0 %v312
    %570 = vmatpush.bf16.msra.mxu0 %v308
    %571 = vmatpush.bf16.msra.mxu0 %v304
    %572 = vmatpush.bf16.msra.mxu0 %v300
    %573 = vmatmul.bf16.gmra.mxu0 %v550
    %v574 = vpop.f32.mrf.mxu0
    %v575 = vadd.f32 0.0, %v574
    %v576 = vpop.f32.mrf.mxu0
    %577 = vdwg.mxu0
    %578 = vmatpush.bf16.msra.mxu0 0
    %579 = vmatpush.bf16.msra.mxu0 0
    %580 = vmatpush.bf16.msra.mxu0 0
    %581 = vmatpush.bf16.msra.mxu0 0
    %582 = vmatpush.bf16.msra.mxu0 %v313
    %583 = vmatpush.bf16.msra.mxu0 %v309
    %584 = vmatpush.bf16.msra.mxu0 %v305
    %585 = vmatpush.bf16.msra.mxu0 %v301
    %586 = vmatmul.bf16.gmra.mxu0 %v550
    %v587 = vpop.f32.mrf.mxu0
    %v588 = vadd.f32 0.0, %v587
    %v589 = vpop.f32.mrf.mxu0
    %590 = vdwg.mxu0
    %591 = vmatpush.bf16.msra.mxu0 0
    %592 = vmatpush.bf16.msra.mxu0 0
    %593 = vmatpush.bf16.msra.mxu0 0
    %594 = vmatpush.bf16.msra.mxu0 0
    %595 = vmatpush.bf16.msra.mxu0 %v314
    %596 = vmatpush.bf16.msra.mxu0 %v310
    %597 = vmatpush.bf16.msra.mxu0 %v306
    %598 = vmatpush.bf16.msra.mxu0 %v302
    %599 = vmatmul.bf16.gmra.mxu0 %v550
    %v600 = vpop.f32.mrf.mxu0
    %v601 = vadd.f32 0.0, %v600
    %v602 = vpop.f32.mrf.mxu0
    %603 = vdwg.mxu0
    %v604 = vadd.f32 %v128, %v562
    %v605 = vadd.f32 %v169, %v575
    %v606 = vxor.u32 %v604, 2147483648
    %v607 = vmul.f32 %v606, 1.442695
    %v608 = vpow.pop %v607
    %v609 = vadd.f32 %v608, 1.0
    %v610 = vrcp.pop %v609
    %v611 = vmul.f32 %v609, %v610
    %v612 = vsub.f32 1.0, %v611
    %v613 = vmul.f32 %v610, %v612
    %v614 = vadd.f32 %v610, %v613
    %vm615 = vweird.f32 %v609
    %vm616 = vweird.f32 %v610
    %vm617 = vmor %vm615, %vm616
    %v618 = vsel %vm617, %v610, %v614
    %v619 = vand.u32 2147483647, %v609
    %vm620 = vcmp.eq.f32.partialorder %v619, 8.507059e+37
    %v621 = vand.u32 %v609, 2147483648
    %v622 = vor.u32 1.1754944e-38, %v621
    %v623 = vsel %vm620, %v622, %v618
    %v624 = vmul.f32 1.0, %v623
    %v625 = vtanh.pop %v605
    %v626 = vxor.u32 %v605, 2147483648
    %v627 = vmul.f32 %v626, 1.442695
    %v628 = vpow.pop %v627
    %v629 = vadd.f32 %v628, 1.0
    %v630 = vrcp.pop %v629
    %v631 = vmul.f32 %v629, %v630
    %v632 = vsub.f32 1.0, %v631
    %v633 = vmul.f32 %v630, %v632
    %v634 = vadd.f32 %v630, %v633
    %vm635 = vweird.f32 %v629
    %vm636 = vweird.f32 %v630
    %vm637 = vmor %vm635, %vm636
    %v638 = vsel %vm637, %v630, %v634
    %v639 = vand.u32 2147483647, %v629
    %vm640 = vcmp.eq.f32.partialorder %v639, 8.507059e+37
    %v641 = vand.u32 %v629, 2147483648
    %v642 = vor.u32 1.1754944e-38, %v641
    %v643 = vsel %vm640, %v642, %v638
    %v644 = vmul.f32 1.0, %v643
    %v645 = vmul.f32 %v624, %v542
    %v646 = vmul.f32 %v624, %v625
    %648 = vrot.lane.b32.xlu0 %v646, 64
    %v649 = vpop.permute.xlu0 %648
    %v651 = vadd.f32 %v645, %v649
    %v652 = vtanh.pop %v651
    %v653 = vmul.f32 %v644, %v652
    %v654 = vpack.c.bf16 %v653, %v653
    %656 = vrot.lane.b32.xlu0 %v654, 64
    %v657 = vpop.permute.xlu0 %656
    %v659 = vsel %vm76, %v657, 0
    %661 = vmatpush.bf16.msra.mxu0 0
    %662 = vmatpush.bf16.msra.mxu0 0
    %663 = vmatpush.bf16.msra.mxu0 0
    %664 = vmatpush.bf16.msra.mxu0 0
    %665 = vmatpush.bf16.msra.mxu0 %v311
    %666 = vmatpush.bf16.msra.mxu0 %v307
    %667 = vmatpush.bf16.msra.mxu0 %v303
    %668 = vmatpush.bf16.msra.mxu0 %v299
    %669 = vmatmul.bf16.gmra.mxu0 %v659
    %v670 = vpop.f32.mrf.mxu0
    %v671 = vadd.f32 0.0, %v670
    %v672 = vpop.f32.mrf.mxu0
    %673 = vdwg.mxu0
    %674 = vmatpush.bf16.msra.mxu0 0
    %675 = vmatpush.bf16.msra.mxu0 0
    %676 = vmatpush.bf16.msra.mxu0 0
    %677 = vmatpush.bf16.msra.mxu0 0
    %678 = vmatpush.bf16.msra.mxu0 %v312
    %679 = vmatpush.bf16.msra.mxu0 %v308
    %680 = vmatpush.bf16.msra.mxu0 %v304
    %681 = vmatpush.bf16.msra.mxu0 %v300
    %682 = vmatmul.bf16.gmra.mxu0 %v659
    %v683 = vpop.f32.mrf.mxu0
    %v684 = vadd.f32 0.0, %v683
    %v685 = vpop.f32.mrf.mxu0
    %686 = vdwg.mxu0
    %687 = vmatpush.bf16.msra.mxu0 0
    %688 = vmatpush.bf16.msra.mxu0 0
    %689 = vmatpush.bf16.msra.mxu0 0
    %690 = vmatpush.bf16.msra.mxu0 0
    %691 = vmatpush.bf16.msra.mxu0 %v313
    %692 = vmatpush.bf16.msra.mxu0 %v309
    %693 = vmatpush.bf16.msra.mxu0 %v305
    %694 = vmatpush.bf16.msra.mxu0 %v301
    %695 = vmatmul.bf16.gmra.mxu0 %v659
    %v696 = vpop.f32.mrf.mxu0
    %v697 = vadd.f32 0.0, %v696
    %v698 = vpop.f32.mrf.mxu0
    %699 = vdwg.mxu0
    %700 = vmatpush.bf16.msra.mxu0 0
    %701 = vmatpush.bf16.msra.mxu0 0
    %702 = vmatpush.bf16.msra.mxu0 0
    %703 = vmatpush.bf16.msra.mxu0 0
    %704 = vmatpush.bf16.msra.mxu0 %v314
    %705 = vmatpush.bf16.msra.mxu0 %v310
    %706 = vmatpush.bf16.msra.mxu0 %v306
    %707 = vmatpush.bf16.msra.mxu0 %v302
    %708 = vmatmul.bf16.gmra.mxu0 %v659
    %v709 = vpop.f32.mrf.mxu0
    %v710 = vadd.f32 0.0, %v709
    %v711 = vpop.f32.mrf.mxu0
    %712 = vdwg.mxu0
    %v713 = vadd.f32 %v131, %v671
    %v714 = vadd.f32 %v172, %v684
    %v715 = vxor.u32 %v713, 2147483648
    %v716 = vmul.f32 %v715, 1.442695
    %v717 = vpow.pop %v716
    %v718 = vadd.f32 %v717, 1.0
    %v719 = vrcp.pop %v718
    %v720 = vmul.f32 %v718, %v719
    %v721 = vsub.f32 1.0, %v720
    %v722 = vmul.f32 %v719, %v721
    %v723 = vadd.f32 %v719, %v722
    %vm724 = vweird.f32 %v718
    %vm725 = vweird.f32 %v719
    %vm726 = vmor %vm724, %vm725
    %v727 = vsel %vm726, %v719, %v723
    %v728 = vand.u32 2147483647, %v718
    %vm729 = vcmp.eq.f32.partialorder %v728, 8.507059e+37
    %v730 = vand.u32 %v718, 2147483648
    %v731 = vor.u32 1.1754944e-38, %v730
    %v732 = vsel %vm729, %v731, %v727
    %v733 = vmul.f32 1.0, %v732
    %v734 = vtanh.pop %v714
    %v735 = vxor.u32 %v714, 2147483648
    %v736 = vmul.f32 %v735, 1.442695
    %v737 = vpow.pop %v736
    %v738 = vadd.f32 %v737, 1.0
    %v739 = vrcp.pop %v738
    %v740 = vmul.f32 %v738, %v739
    %v741 = vsub.f32 1.0, %v740
    %v742 = vmul.f32 %v739, %v741
    %v743 = vadd.f32 %v739, %v742
    %vm744 = vweird.f32 %v738
    %vm745 = vweird.f32 %v739
    %vm746 = vmor %vm744, %vm745
    %v747 = vsel %vm746, %v739, %v743
    %v748 = vand.u32 2147483647, %v738
    %vm749 = vcmp.eq.f32.partialorder %v748, 8.507059e+37
    %v750 = vand.u32 %v738, 2147483648
    %v751 = vor.u32 1.1754944e-38, %v750
    %v752 = vsel %vm749, %v751, %v747
    %v753 = vmul.f32 1.0, %v752
    %v754 = vmul.f32 %v733, %v651
    %v755 = vmul.f32 %v733, %v734
    %757 = vrot.lane.b32.xlu0 %v755, 64
    %v758 = vpop.permute.xlu0 %757
    %v760 = vadd.f32 %v754, %v758
    %v761 = vtanh.pop %v760
    %v762 = vmul.f32 %v753, %v761
    %v763 = vpack.c.bf16 %v762, %v762
    %765 = vrot.lane.b32.xlu0 %v763, 64
    %v766 = vpop.permute.xlu0 %765
    %v768 = vsel %vm76, %v766, 0
    %770 = vmatpush.bf16.msra.mxu0 0
    %771 = vmatpush.bf16.msra.mxu0 0
    %772 = vmatpush.bf16.msra.mxu0 0
    %773 = vmatpush.bf16.msra.mxu0 0
    %774 = vmatpush.bf16.msra.mxu0 %v311
    %775 = vmatpush.bf16.msra.mxu0 %v307
    %776 = vmatpush.bf16.msra.mxu0 %v303
    %777 = vmatpush.bf16.msra.mxu0 %v299
    %778 = vmatmul.bf16.gmra.mxu0 %v768
    %v779 = vpop.f32.mrf.mxu0
    %v780 = vadd.f32 0.0, %v779
    %v781 = vpop.f32.mrf.mxu0
    %782 = vdwg.mxu0
    %783 = vmatpush.bf16.msra.mxu0 0
    %784 = vmatpush.bf16.msra.mxu0 0
    %785 = vmatpush.bf16.msra.mxu0 0
    %786 = vmatpush.bf16.msra.mxu0 0
    %787 = vmatpush.bf16.msra.mxu0 %v312
    %788 = vmatpush.bf16.msra.mxu0 %v308
    %789 = vmatpush.bf16.msra.mxu0 %v304
    %790 = vmatpush.bf16.msra.mxu0 %v300
    %791 = vmatmul.bf16.gmra.mxu0 %v768
    %v792 = vpop.f32.mrf.mxu0
    %v793 = vadd.f32 0.0, %v792
    %v794 = vpop.f32.mrf.mxu0
    %795 = vdwg.mxu0
    %796 = vmatpush.bf16.msra.mxu0 0
    %797 = vmatpush.bf16.msra.mxu0 0
    %798 = vmatpush.bf16.msra.mxu0 0
    %799 = vmatpush.bf16.msra.mxu0 0
    %800 = vmatpush.bf16.msra.mxu0 %v313
    %801 = vmatpush.bf16.msra.mxu0 %v309
    %802 = vmatpush.bf16.msra.mxu0 %v305
    %803 = vmatpush.bf16.msra.mxu0 %v301
    %804 = vmatmul.bf16.gmra.mxu0 %v768
    %v805 = vpop.f32.mrf.mxu0
    %v806 = vadd.f32 0.0, %v805
    %v807 = vpop.f32.mrf.mxu0
    %808 = vdwg.mxu0
    %809 = vmatpush.bf16.msra.mxu0 0
    %810 = vmatpush.bf16.msra.mxu0 0
    %811 = vmatpush.bf16.msra.mxu0 0
    %812 = vmatpush.bf16.msra.mxu0 0
    %813 = vmatpush.bf16.msra.mxu0 %v314
    %814 = vmatpush.bf16.msra.mxu0 %v310
    %815 = vmatpush.bf16.msra.mxu0 %v306
    %816 = vmatpush.bf16.msra.mxu0 %v302
    %817 = vmatmul.bf16.gmra.mxu0 %v768
    %v818 = vpop.f32.mrf.mxu0
    %v819 = vadd.f32 0.0, %v818
    %v820 = vpop.f32.mrf.mxu0
    %821 = vdwg.mxu0
    %v822 = vadd.f32 %v134, %v780
    %v823 = vadd.f32 %v175, %v793
    %v824 = vxor.u32 %v822, 2147483648
    %v825 = vmul.f32 %v824, 1.442695
    %v826 = vpow.pop %v825
    %v827 = vadd.f32 %v826, 1.0
    %v828 = vrcp.pop %v827
    %v829 = vmul.f32 %v827, %v828
    %v830 = vsub.f32 1.0, %v829
    %v831 = vmul.f32 %v828, %v830
    %v832 = vadd.f32 %v828, %v831
    %vm833 = vweird.f32 %v827
    %vm834 = vweird.f32 %v828
    %vm835 = vmor %vm833, %vm834
    %v836 = vsel %vm835, %v828, %v832
    %v837 = vand.u32 2147483647, %v827
    %vm838 = vcmp.eq.f32.partialorder %v837, 8.507059e+37
    %v839 = vand.u32 %v827, 2147483648
    %v840 = vor.u32 1.1754944e-38, %v839
    %v841 = vsel %vm838, %v840, %v836
    %v842 = vmul.f32 1.0, %v841
    %v843 = vtanh.pop %v823
    %v844 = vxor.u32 %v823, 2147483648
    %v845 = vmul.f32 %v844, 1.442695
    %v846 = vpow.pop %v845
    %v847 = vadd.f32 %v846, 1.0
    %v848 = vrcp.pop %v847
    %v849 = vmul.f32 %v847, %v848
    %v850 = vsub.f32 1.0, %v849
    %v851 = vmul.f32 %v848, %v850
    %v852 = vadd.f32 %v848, %v851
    %vm853 = vweird.f32 %v847
    %vm854 = vweird.f32 %v848
    %vm855 = vmor %vm853, %vm854
    %v856 = vsel %vm855, %v848, %v852
    %v857 = vand.u32 2147483647, %v847
    %vm858 = vcmp.eq.f32.partialorder %v857, 8.507059e+37
    %v859 = vand.u32 %v847, 2147483648
    %v860 = vor.u32 1.1754944e-38, %v859
    %v861 = vsel %vm858, %v860, %v856
    %v862 = vmul.f32 1.0, %v861
    %v863 = vmul.f32 %v842, %v760
    %v864 = vmul.f32 %v842, %v843
    %866 = vrot.lane.b32.xlu0 %v864, 64
    %v867 = vpop.permute.xlu0 %866
    %v869 = vadd.f32 %v863, %v867
    %v870 = vtanh.pop %v869
    %v871 = vmul.f32 %v862, %v870
    %v872 = vpack.c.bf16 %v871, %v871
    %874 = vrot.lane.b32.xlu0 %v872, 64
    %v875 = vpop.permute.xlu0 %874
    %v877 = vsel %vm76, %v875, 0
    %879 = vmatpush.bf16.msra.mxu0 0
    %880 = vmatpush.bf16.msra.mxu0 0
    %881 = vmatpush.bf16.msra.mxu0 0
    %882 = vmatpush.bf16.msra.mxu0 0
    %883 = vmatpush.bf16.msra.mxu0 %v311
    %884 = vmatpush.bf16.msra.mxu0 %v307
    %885 = vmatpush.bf16.msra.mxu0 %v303
    %886 = vmatpush.bf16.msra.mxu0 %v299
    %887 = vmatmul.bf16.gmra.mxu0 %v877
    %v888 = vpop.f32.mrf.mxu0
    %v889 = vadd.f32 0.0, %v888
    %v890 = vpop.f32.mrf.mxu0
    %891 = vdwg.mxu0
    %892 = vmatpush.bf16.msra.mxu0 0
    %893 = vmatpush.bf16.msra.mxu0 0
    %894 = vmatpush.bf16.msra.mxu0 0
    %895 = vmatpush.bf16.msra.mxu0 0
    %896 = vmatpush.bf16.msra.mxu0 %v312
    %897 = vmatpush.bf16.msra.mxu0 %v308
    %898 = vmatpush.bf16.msra.mxu0 %v304
    %899 = vmatpush.bf16.msra.mxu0 %v300
    %900 = vmatmul.bf16.gmra.mxu0 %v877
    %v901 = vpop.f32.mrf.mxu0
    %v902 = vadd.f32 0.0, %v901
    %v903 = vpop.f32.mrf.mxu0
    %904 = vdwg.mxu0
    %905 = vmatpush.bf16.msra.mxu0 0
    %906 = vmatpush.bf16.msra.mxu0 0
    %907 = vmatpush.bf16.msra.mxu0 0
    %908 = vmatpush.bf16.msra.mxu0 0
    %909 = vmatpush.bf16.msra.mxu0 %v313
    %910 = vmatpush.bf16.msra.mxu0 %v309
    %911 = vmatpush.bf16.msra.mxu0 %v305
    %912 = vmatpush.bf16.msra.mxu0 %v301
    %913 = vmatmul.bf16.gmra.mxu0 %v877
    %v914 = vpop.f32.mrf.mxu0
    %v915 = vadd.f32 0.0, %v914
    %v916 = vpop.f32.mrf.mxu0
    %917 = vdwg.mxu0
    %918 = vmatpush.bf16.msra.mxu0 0
    %919 = vmatpush.bf16.msra.mxu0 0
    %920 = vmatpush.bf16.msra.mxu0 0
    %921 = vmatpush.bf16.msra.mxu0 0
    %922 = vmatpush.bf16.msra.mxu0 %v314
    %923 = vmatpush.bf16.msra.mxu0 %v310
    %924 = vmatpush.bf16.msra.mxu0 %v306
    %925 = vmatpush.bf16.msra.mxu0 %v302
    %926 = vmatmul.bf16.gmra.mxu0 %v877
    %v927 = vpop.f32.mrf.mxu0
    %v928 = vadd.f32 0.0, %v927
    %v929 = vpop.f32.mrf.mxu0
    %930 = vdwg.mxu0
    %v931 = vadd.f32 %v137, %v889
    %v932 = vadd.f32 %v178, %v902
    %v933 = vxor.u32 %v931, 2147483648
    %v934 = vmul.f32 %v933, 1.442695
    %v935 = vpow.pop %v934
    %v936 = vadd.f32 %v935, 1.0
    %v937 = vrcp.pop %v936
    %v938 = vmul.f32 %v936, %v937
    %v939 = vsub.f32 1.0, %v938
    %v940 = vmul.f32 %v937, %v939
    %v941 = vadd.f32 %v937, %v940
    %vm942 = vweird.f32 %v936
    %vm943 = vweird.f32 %v937
    %vm944 = vmor %vm942, %vm943
    %v945 = vsel %vm944, %v937, %v941
    %v946 = vand.u32 2147483647, %v936
    %vm947 = vcmp.eq.f32.partialorder %v946, 8.507059e+37
    %v948 = vand.u32 %v936, 2147483648
    %v949 = vor.u32 1.1754944e-38, %v948
    %v950 = vsel %vm947, %v949, %v945
    %v951 = vmul.f32 1.0, %v950
    %v952 = vtanh.pop %v932
    %v953 = vxor.u32 %v932, 2147483648
    %v954 = vmul.f32 %v953, 1.442695
    %v955 = vpow.pop %v954
    %v956 = vadd.f32 %v955, 1.0
    %v957 = vrcp.pop %v956
    %v958 = vmul.f32 %v956, %v957
    %v959 = vsub.f32 1.0, %v958
    %v960 = vmul.f32 %v957, %v959
    %v961 = vadd.f32 %v957, %v960
    %vm962 = vweird.f32 %v956
    %vm963 = vweird.f32 %v957
    %vm964 = vmor %vm962, %vm963
    %v965 = vsel %vm964, %v957, %v961
    %v966 = vand.u32 2147483647, %v956
    %vm967 = vcmp.eq.f32.partialorder %v966, 8.507059e+37
    %v968 = vand.u32 %v956, 2147483648
    %v969 = vor.u32 1.1754944e-38, %v968
    %v970 = vsel %vm967, %v969, %v965
    %v971 = vmul.f32 1.0, %v970
    %v972 = vmul.f32 %v951, %v869
    %v973 = vmul.f32 %v951, %v952
    %975 = vrot.lane.b32.xlu0 %v973, 64
    %v976 = vpop.permute.xlu0 %975
    %v978 = vadd.f32 %v972, %v976
    %v979 = vtanh.pop %v978
    %v980 = vmul.f32 %v971, %v979
    %v981 = vpack.c.bf16 %v980, %v980
    %983 = vrot.lane.b32.xlu0 %v981, 64
    %v984 = vpop.permute.xlu0 %983
    %v986 = vsel %vm76, %v984, 0
    %988 = vmatpush.bf16.msra.mxu0 0
    %989 = vmatpush.bf16.msra.mxu0 0
    %990 = vmatpush.bf16.msra.mxu0 0
    %991 = vmatpush.bf16.msra.mxu0 0
    %992 = vmatpush.bf16.msra.mxu0 %v311
    %993 = vmatpush.bf16.msra.mxu0 %v307
    %994 = vmatpush.bf16.msra.mxu0 %v303
    %995 = vmatpush.bf16.msra.mxu0 %v299
    %996 = vmatmul.bf16.gmra.mxu0 %v986
    %v997 = vpop.f32.mrf.mxu0
    %v998 = vadd.f32 0.0, %v997
    %v999 = vpop.f32.mrf.mxu0
    %1000 = vdwg.mxu0
    %1001 = vmatpush.bf16.msra.mxu0 0
    %1002 = vmatpush.bf16.msra.mxu0 0
    %1003 = vmatpush.bf16.msra.mxu0 0
    %1004 = vmatpush.bf16.msra.mxu0 0
    %1005 = vmatpush.bf16.msra.mxu0 %v312
    %1006 = vmatpush.bf16.msra.mxu0 %v308
    %1007 = vmatpush.bf16.msra.mxu0 %v304
    %1008 = vmatpush.bf16.msra.mxu0 %v300
    %1009 = vmatmul.bf16.gmra.mxu0 %v986
    %v1010 = vpop.f32.mrf.mxu0
    %v1011 = vadd.f32 0.0, %v1010
    %v1012 = vpop.f32.mrf.mxu0
    %1013 = vdwg.mxu0
    %1014 = vmatpush.bf16.msra.mxu0 0
    %1015 = vmatpush.bf16.msra.mxu0 0
    %1016 = vmatpush.bf16.msra.mxu0 0
    %1017 = vmatpush.bf16.msra.mxu0 0
    %1018 = vmatpush.bf16.msra.mxu0 %v313
    %1019 = vmatpush.bf16.msra.mxu0 %v309
    %1020 = vmatpush.bf16.msra.mxu0 %v305
    %1021 = vmatpush.bf16.msra.mxu0 %v301
    %1022 = vmatmul.bf16.gmra.mxu0 %v986
    %v1023 = vpop.f32.mrf.mxu0
    %v1024 = vadd.f32 0.0, %v1023
    %v1025 = vpop.f32.mrf.mxu0
    %1026 = vdwg.mxu0
    %1027 = vmatpush.bf16.msra.mxu0 0
    %1028 = vmatpush.bf16.msra.mxu0 0
    %1029 = vmatpush.bf16.msra.mxu0 0
    %1030 = vmatpush.bf16.msra.mxu0 0
    %1031 = vmatpush.bf16.msra.mxu0 %v314
    %1032 = vmatpush.bf16.msra.mxu0 %v310
    %1033 = vmatpush.bf16.msra.mxu0 %v306
    %1034 = vmatpush.bf16.msra.mxu0 %v302
    %1035 = vmatmul.bf16.gmra.mxu0 %v986
    %v1036 = vpop.f32.mrf.mxu0
    %v1037 = vadd.f32 0.0, %v1036
    %v1038 = vpop.f32.mrf.mxu0
    %1039 = vdwg.mxu0
    %v1040 = vadd.f32 %v140, %v998
    %v1041 = vadd.f32 %v181, %v1011
    %v1042 = vxor.u32 %v1040, 2147483648
    %v1043 = vmul.f32 %v1042, 1.442695
    %v1044 = vpow.pop %v1043
    %v1045 = vadd.f32 %v1044, 1.0
    %v1046 = vrcp.pop %v1045
    %v1047 = vmul.f32 %v1045, %v1046
    %v1048 = vsub.f32 1.0, %v1047
    %v1049 = vmul.f32 %v1046, %v1048
    %v1050 = vadd.f32 %v1046, %v1049
    %vm1051 = vweird.f32 %v1045
    %vm1052 = vweird.f32 %v1046
    %vm1053 = vmor %vm1051, %vm1052
    %v1054 = vsel %vm1053, %v1046, %v1050
    %v1055 = vand.u32 2147483647, %v1045
    %vm1056 = vcmp.eq.f32.partialorder %v1055, 8.507059e+37
    %v1057 = vand.u32 %v1045, 2147483648
    %v1058 = vor.u32 1.1754944e-38, %v1057
    %v1059 = vsel %vm1056, %v1058, %v1054
    %v1060 = vmul.f32 1.0, %v1059
    %v1061 = vtanh.pop %v1041
    %v1062 = vxor.u32 %v1041, 2147483648
    %v1063 = vmul.f32 %v1062, 1.442695
    %v1064 = vpow.pop %v1063
    %v1065 = vadd.f32 %v1064, 1.0
    %v1066 = vrcp.pop %v1065
    %v1067 = vmul.f32 %v1065, %v1066
    %v1068 = vsub.f32 1.0, %v1067
    %v1069 = vmul.f32 %v1066, %v1068
    %v1070 = vadd.f32 %v1066, %v1069
    %vm1071 = vweird.f32 %v1065
    %vm1072 = vweird.f32 %v1066
    %vm1073 = vmor %vm1071, %vm1072
    %v1074 = vsel %vm1073, %v1066, %v1070
    %v1075 = vand.u32 2147483647, %v1065
    %vm1076 = vcmp.eq.f32.partialorder %v1075, 8.507059e+37
    %v1077 = vand.u32 %v1065, 2147483648
    %v1078 = vor.u32 1.1754944e-38, %v1077
    %v1079 = vsel %vm1076, %v1078, %v1074
    %v1080 = vmul.f32 1.0, %v1079
    %v1081 = vmul.f32 %v1060, %v978
    %v1082 = vmul.f32 %v1060, %v1061
    %1084 = vrot.lane.b32.xlu0 %v1082, 64
    %v1085 = vpop.permute.xlu0 %1084
    %v1087 = vadd.f32 %v1081, %v1085
    %v1088 = vtanh.pop %v1087
    %v1089 = vmul.f32 %v1080, %v1088
    %v1090 = vpack.c.bf16 %v1089, %v1089
    %1092 = vrot.lane.b32.xlu0 %v1090, 64
    %v1093 = vpop.permute.xlu0 %1092
    %v1095 = vsel %vm76, %v1093, 0
    %1097 = vmatpush.bf16.msra.mxu0 0
    %1098 = vmatpush.bf16.msra.mxu0 0
    %1099 = vmatpush.bf16.msra.mxu0 0
    %1100 = vmatpush.bf16.msra.mxu0 0
    %1101 = vmatpush.bf16.msra.mxu0 %v313
    %1102 = vmatpush.bf16.msra.mxu0 %v309
    %1103 = vmatpush.bf16.msra.mxu0 %v305
    %1104 = vmatpush.bf16.msra.mxu0 %v301
    %1105 = vmatmul.bf16.gmra.mxu0 %v1095
    %v1106 = vpop.f32.mrf.mxu0
    %v1107 = vadd.f32 0.0, %v1106
    %v1108 = vpop.f32.mrf.mxu0
    %1109 = vdwg.mxu0
    %1110 = vmatpush.bf16.msra.mxu0 0
    %1111 = vmatpush.bf16.msra.mxu0 0
    %1112 = vmatpush.bf16.msra.mxu0 0
    %1113 = vmatpush.bf16.msra.mxu0 0
    %1114 = vmatpush.bf16.msra.mxu0 %v314
    %1115 = vmatpush.bf16.msra.mxu0 %v310
    %1116 = vmatpush.bf16.msra.mxu0 %v306
    %1117 = vmatpush.bf16.msra.mxu0 %v302
    %1118 = vmatmul.bf16.gmra.mxu0 %v1095
    %v1119 = vpop.f32.mrf.mxu0
    %v1120 = vadd.f32 0.0, %v1119
    %v1121 = vpop.f32.mrf.mxu0
    %1122 = vdwg.mxu0
    %v1123 = vadd.f32 %v370, %v1120
    %v1124 = vadd.f32 %v479, %v1037
    %v1125 = vadd.f32 %v588, %v928
    %v1126 = vadd.f32 %v697, %v819
    %v1127 = vadd.f32 %v806, %v710
    %v1128 = vadd.f32 %v915, %v601
    %v1129 = vadd.f32 %v1024, %v492
    %v1130 = vadd.f32 %v1107, %v383
    %v1131 = vld [vmem:[%s5] sm:$0x1]
    %v1133 = vperm.slane %v1131, 0
    %v1135 = vadd.f32 %v1123, %v1133
    %v1136 = vadd.f32 %v1124, %v1133
    %v1137 = vadd.f32 %v1125, %v1133
    %v1138 = vadd.f32 %v1126, %v1133
    %v1139 = vadd.f32 %v1127, %v1133
    %v1140 = vadd.f32 %v1128, %v1133
    %v1141 = vadd.f32 %v1129, %v1133
    %v1142 = vadd.f32 %v1130, %v1133
    %v1143 = vmax.f32 %v1135, 0.0
    %v1144 = vmax.f32 %v1136, 0.0
    %v1145 = vmax.f32 %v1137, 0.0
    %v1146 = vmax.f32 %v1138, 0.0
    %v1147 = vmax.f32 %v1139, 0.0
    %v1148 = vmax.f32 %v1140, 0.0
    %v1149 = vmax.f32 %v1141, 0.0
    %v1150 = vmax.f32 %v1142, 0.0
    %v1151 = vld [vmem:[%s6] sm:$0xff]
    %v1152 = vld [vmem:[%s6 + $0x8] sm:$0xff]
    %v1153 = vld [vmem:[%s6 + $0x10] sm:$0xff]
    %v1154 = vld [vmem:[%s6 + $0x18] sm:$0xff]
    %v1155 = vld [vmem:[%s6 + $0x20] sm:$0xff]
    %v1156 = vld [vmem:[%s6 + $0x28] sm:$0xff]
    %v1157 = vld [vmem:[%s6 + $0x30] sm:$0xff]
    %v1158 = vld [vmem:[%s6 + $0x38] sm:$0xff]
    %v1159 = vld [vmem:[%s6 + $0x40] sm:$0xff]
    %v1160 = vld [vmem:[%s6 + $0x48] sm:$0xff]
    %v1161 = vld [vmem:[%s6 + $0x50] sm:$0xff]
    %v1162 = vld [vmem:[%s6 + $0x58] sm:$0xff]
    %v1163 = vld [vmem:[%s6 + $0x60] sm:$0xff]
    %v1164 = vld [vmem:[%s6 + $0x68] sm:$0xff]
    %v1165 = vld [vmem:[%s6 + $0x70] sm:$0xff]
    %v1166 = vld [vmem:[%s6 + $0x78] sm:$0xff]
    %v1167 = vld [vmem:[%s7] sm:$0x1]
    %v1169 = vperm.slane %v1167, 0
    %1171 = vmatpush.msra.mxu0 %v1166
    %1172 = vmatpush.msra.mxu0 %v1165
    %1173 = vmatpush.msra.mxu0 %v1164
    %1174 = vmatpush.msra.mxu0 %v1163
    %1175 = vmatpush.msra.mxu0 %v1162
    %1176 = vmatpush.msra.mxu0 %v1161
    %1177 = vmatpush.msra.mxu0 %v1160
    %1178 = vmatpush.msra.mxu0 %v1159
    %1179 = vmatpush.msra.mxu0 %v1158
    %1180 = vmatpush.msra.mxu0 %v1157
    %1181 = vmatpush.msra.mxu0 %v1156
    %1182 = vmatpush.msra.mxu0 %v1155
    %1183 = vmatpush.msra.mxu0 %v1154
    %1184 = vmatpush.msra.mxu0 %v1153
    %1185 = vmatpush.msra.mxu0 %v1152
    %1186 = vmatpush.msra.mxu0 %v1151
    %1187 = vmatmul.f32.gmra.mxu0 %v1143
    %v1188 = vpop.f32.mrf.mxu0
    %v1189 = vadd.f32 %v1169, %v1188
    %1190 = vmatmul.f32.gmra.mxu0 %v1144
    %v1191 = vpop.f32.mrf.mxu0
    %v1192 = vadd.f32 %v1169, %v1191
    %1193 = vmatmul.f32.gmra.mxu0 %v1145
    %v1194 = vpop.f32.mrf.mxu0
    %v1195 = vadd.f32 %v1169, %v1194
    %1196 = vmatmul.f32.gmra.mxu0 %v1146
    %v1197 = vpop.f32.mrf.mxu0
    %v1198 = vadd.f32 %v1169, %v1197
    %1199 = vmatmul.f32.gmra.mxu0 %v1147
    %v1200 = vpop.f32.mrf.mxu0
    %v1201 = vadd.f32 %v1169, %v1200
    %1202 = vmatmul.f32.gmra.mxu0 %v1148
    %v1203 = vpop.f32.mrf.mxu0
    %v1204 = vadd.f32 %v1169, %v1203
    %1205 = vmatmul.f32.gmra.mxu0 %v1149
    %v1206 = vpop.f32.mrf.mxu0
    %v1207 = vadd.f32 %v1169, %v1206
    %1208 = vmatmul.f32.gmra.mxu0 %v1150
    %v1209 = vpop.f32.mrf.mxu0
    %v1210 = vadd.f32 %v1169, %v1209
    %1211 = vdwg.mxu0
    %v1212 = vld [vmem:[%s0] sm:$0xff]
    %v1213 = vld [vmem:[%s0 + $0x8] sm:$0xff]
    %v1214 = vld [vmem:[%s0 + $0x10] sm:$0xff]
    %v1215 = vld [vmem:[%s0 + $0x18] sm:$0xff]
    %v1216 = vld [vmem:[%s0 + $0x20] sm:$0xff]
    %v1217 = vld [vmem:[%s0 + $0x28] sm:$0xff]
    %v1218 = vld [vmem:[%s0 + $0x30] sm:$0xff]
    %v1219 = vld [vmem:[%s0 + $0x38] sm:$0xff]
    %v1220 = vadd.f32 %v1212, %v1189
    %v1221 = vadd.f32 %v1213, %v1192
    %v1222 = vadd.f32 %v1214, %v1195
    %v1223 = vadd.f32 %v1215, %v1198
    %v1224 = vadd.f32 %v1216, %v1201
    %v1225 = vadd.f32 %v1217, %v1204
    %v1226 = vadd.f32 %v1218, %v1207
    %v1227 = vadd.f32 %v1219, %v1210
    %vm1228 = vcmask 261120
    %1229 = vst.msk [vmem:[%s8] sm:$0xff] %vm1228, %v1220
    %1230 = vst.msk [vmem:[%s8 + $0x8] sm:$0xff] %vm1228, %v1221
    %1231 = vst.msk [vmem:[%s8 + $0x10] sm:$0xff] %vm1228, %v1222
    %1232 = vst.msk [vmem:[%s8 + $0x18] sm:$0xff] %vm1228, %v1223
    %1233 = vst.msk [vmem:[%s8 + $0x20] sm:$0xff] %vm1228, %v1224
    %1234 = vst.msk [vmem:[%s8 + $0x28] sm:$0xff] %vm1228, %v1225
    %1235 = vst.msk [vmem:[%s8 + $0x30] sm:$0xff] %vm1228, %v1226
    %1236 = vst.msk [vmem:[%s8 + $0x38] sm:$0xff] %vm1228, %v1227
    // Predicated region
    $region38: #{tpu_custom_call.1} parent=1 // pred_check
      _
    $region39: #{tpu_custom_call.1} parent=1 // pred_check_branch
      %1238 = sbr.rel (0) target = $region41
    $region40: #{tpu_custom_call.1} parent=1 // pred_region
      _
    $region41: #{tpu_custom_call.1} parent=1 // pred_fallthru
      _
    // Predicated region
    $region42: #{tpu_custom_call.1} parent=1 // pred_check
      _
    $region43: #{tpu_custom_call.1} parent=1 // pred_check_branch
      %1240 = sbr.rel (0) target = $region45
    $region44: #{tpu_custom_call.1} parent=1 // pred_region
      _
    $region45: #{tpu_custom_call.1} parent=1 // pred_fallthru
      _
    %1241 = vsyncpa [#allocation3], 1

</llo_original>
